<compile_context>
chip_gen: v5e
topology: v5e:2x2
jax: 0.10.0
libtpu: 0.0.40
codegen_flags: <defaults>
</compile_context>

<pallas_src>
import jax
import jax.numpy as jnp
from jax import lax
from jax.experimental import pallas as pl
from jax.experimental.pallas import tpu as pltpu

EMB = 64
IN_DIM = 11
EDGE_DIM = 4
OUT_DIM = 1
NUM_LAYERS = 4
BN_EPS = 1e-5


# ------------------------------ fused kernel -------------------------------

def _fused_mpnn_kernel(x_ref, src_oh_ref, dst_oh_ref, ea_ref,
                       w_in_ref, b_in_ref, w_pred_ref, b_pred_ref,
                       w1_ref, w1e_ref, b1_ref, w2_ref, b2_ref,
                       w3_ref, b3_ref, w4_ref, b4_ref,
                       out_ref, h_ref):
    l = pl.program_id(0)

    # phase 0: input linear; h stays resident in VMEM for the whole grid
    @pl.when(l == 0)
    def _():
        h_ref[...] = (
            jnp.dot(x_ref[...], w_in_ref[...], preferred_element_type=jnp.float32)
            + b_in_ref[...])

    h = h_ref[...]                                                    # (N, D)

    # bf16 one-hots widened on-chip (exact); matmuls accumulate in f32.
    src_oh = src_oh_ref[...].astype(jnp.float32)                      # (E, N)
    dst_oh = dst_oh_ref[...].astype(jnp.float32)                      # (E, N)

    # gather node features at edge endpoints via one-hot matmuls (MXU)
    h_i = jnp.dot(dst_oh, h, preferred_element_type=jnp.float32)      # target
    h_j = jnp.dot(src_oh, h, preferred_element_type=jnp.float32)      # source

    # message MLP: merged K=2D matmul for [h_i|h_j]; edge term kept separate
    m = (jnp.dot(jnp.concatenate([h_i, h_j], axis=-1), w1_ref[...],
                 preferred_element_type=jnp.float32)
         + jnp.dot(ea_ref[...], w1e_ref[...], preferred_element_type=jnp.float32)
         + b1_ref[...])
    m = jnp.maximum(m, 0.0)
    m = jnp.dot(m, w2_ref[...], preferred_element_type=jnp.float32) + b2_ref[...]
    m = jnp.maximum(m, 0.0)                                           # (E, D)

    # aggregate: scatter-add onto target nodes = transposed-LHS matmul
    # (contract the edge axis of dst_oh with the edge axis of m)
    aggr = lax.dot_general(dst_oh, m,
                           dimension_numbers=(((0,), (0,)), ((), ())),
                           preferred_element_type=jnp.float32)        # (N, D)

    # update MLP: merged K=2D matmul for [h | aggr]
    u = (jnp.dot(jnp.concatenate([h, aggr], axis=-1), w3_ref[...],
                 preferred_element_type=jnp.float32)
         + b3_ref[...])
    u = jnp.maximum(u, 0.0)
    u = jnp.dot(u, w4_ref[...], preferred_element_type=jnp.float32) + b4_ref[...]
    u = jnp.maximum(u, 0.0)

    h_new = h + u                                                     # residual
    h_ref[...] = h_new

    # final phase: prediction head
    @pl.when(l == pl.num_programs(0) - 1)
    def _():
        out_ref[...] = (
            jnp.dot(h_new, w_pred_ref[...], preferred_element_type=jnp.float32)
            + b_pred_ref[...])


# ------------------------------ call wrapper -------------------------------

def _full_spec(a):
    # whole-array block, same block for every layer step (DMA'd once)
    nd = a.ndim
    return pl.BlockSpec(tuple(a.shape), lambda l, nd=nd: (0,) * nd)


def _layer_spec(a):
    # stacked-per-layer weight: leading layer dim selected by the grid index
    # and squeezed away so the kernel sees a 2-D tile.
    nd = a.ndim
    return pl.BlockSpec((None,) + tuple(a.shape[1:]),
                        lambda l, nd=nd: (l,) + (0,) * (nd - 1))


def mpnn_forward(x, edge_index, edge_attr, params):
    n = x.shape[0]
    e = edge_attr.shape[0]
    d = EMB

    # Dense gather/scatter operators in bf16 (0/1 exact) — halves the HBM and
    # VMEM footprint of the dominant (E, N) operands.
    src_oh = jax.nn.one_hot(edge_index[0], n, dtype=jnp.bfloat16)   # (E, N)
    dst_oh = jax.nn.one_hot(edge_index[1], n, dtype=jnp.bfloat16)   # (E, N)

    const_args = (x, src_oh, dst_oh, edge_attr,
                  params["w_in"], params["b_in"],
                  params["w_pred"], params["b_pred"])
    layer_args = (params["w1"], params["w1e"], params["b1"],
                  params["w2"], params["b2"],
                  params["w3"], params["b3"],
                  params["w4"], params["b4"])

    in_specs = ([_full_spec(a) for a in const_args]
                + [_layer_spec(a) for a in layer_args])

    out_shape = jax.ShapeDtypeStruct((n, OUT_DIM), jnp.float32)
    out_spec = pl.BlockSpec((n, OUT_DIM), lambda l: (0, 0))

    # advisory cost estimate for XLA's scheduler
    macs = n * IN_DIM * d + n * d * OUT_DIM
    macs += NUM_LAYERS * (2 * e * n * d                         # gathers
                          + e * (2 * d) * d + e * EDGE_DIM * d  # message lin1
                          + e * d * d                           # message lin2
                          + e * n * d                           # scatter-add
                          + n * (2 * d) * d + n * d * d)        # update MLP
    bytes_accessed = (sum(int(a.size) * a.dtype.itemsize
                          for a in const_args + layer_args)
                      + n * OUT_DIM * 4)

    return pl.pallas_call(
        _fused_mpnn_kernel,
        grid_spec=pltpu.PrefetchScalarGridSpec(
            num_scalar_prefetch=0,
            grid=(NUM_LAYERS,),
            in_specs=in_specs,
            out_specs=out_spec,
            scratch_shapes=[pltpu.VMEM((n, EMB), jnp.float32)]),   # resident h
        out_shape=out_shape,
        compiler_params=pltpu.CompilerParams(
            # layer axis carries h -> strictly sequential
            dimension_semantics=("arbitrary",)),
        cost_estimate=pl.CostEstimate(flops=2 * macs,
                                      transcendentals=0,
                                      bytes_accessed=int(bytes_accessed)),
    )(*const_args, *layer_args)


# ----------------------------- parameter setup -----------------------------

def _make_linear(key, fan_in, fan_out):
    kw, kb = jax.random.split(key)
    bound = 1.0 / jnp.sqrt(jnp.float32(fan_in))
    w = jax.random.uniform(kw, (fan_in, fan_out), jnp.float32, -bound, bound)
    b = jax.random.uniform(kb, (fan_out,), jnp.float32, -bound, bound)
    return w, b


def _make_bn(key, dim):
    kg, kb, km, kv = jax.random.split(key, 4)
    gamma = 1.0 + 0.1 * jax.random.normal(kg, (dim,), jnp.float32)
    beta = 0.1 * jax.random.normal(kb, (dim,), jnp.float32)
    mean = 0.1 * jax.random.normal(km, (dim,), jnp.float32)
    var = jnp.abs(jax.random.normal(kv, (dim,), jnp.float32)) + 0.5
    return gamma, beta, mean, var


def _fold_bn(w, b, bn):
    gamma, beta, mean, var = bn
    s = gamma / jnp.sqrt(var + BN_EPS)
    return w * s[None, :], b * s + (beta - mean * s)


def make_params(key):
    keys = jax.random.split(key, 2 + NUM_LAYERS)
    w_in, b_in = _make_linear(keys[0], IN_DIM, EMB)
    w_pred, b_pred = _make_linear(keys[1], EMB, OUT_DIM)

    per = {k: [] for k in ("w1", "w1e", "b1", "w2", "b2", "w3", "b3", "w4", "b4")}
    for l in range(NUM_LAYERS):
        ks = jax.random.split(keys[2 + l], 8)
        # message MLP (BN folded into W/b, eval mode)
        w1, b1 = _make_linear(ks[0], 2 * EMB + EDGE_DIM, EMB)
        w1, b1 = _fold_bn(w1, b1, _make_bn(ks[1], EMB))
        w2, b2 = _make_linear(ks[2], EMB, EMB)
        w2, b2 = _fold_bn(w2, b2, _make_bn(ks[3], EMB))
        # update MLP
        w3, b3 = _make_linear(ks[4], 2 * EMB, EMB)
        w3, b3 = _fold_bn(w3, b3, _make_bn(ks[5], EMB))
        w4, b4 = _make_linear(ks[6], EMB, EMB)
        w4, b4 = _fold_bn(w4, b4, _make_bn(ks[7], EMB))
        per["w1"].append(w1[:2 * EMB])          # [h_i | h_j] rows merged
        per["w1e"].append(w1[2 * EMB:])         # edge rows kept separate
        per["b1"].append(b1[None, :])
        per["w2"].append(w2);  per["b2"].append(b2[None, :])
        per["w3"].append(w3);  per["b3"].append(b3[None, :])
        per["w4"].append(w4);  per["b4"].append(b4[None, :])

    stacked = {k: jnp.stack(v, axis=0) for k, v in per.items()}
    return dict(w_in=w_in, b_in=b_in[None, :],
                w_pred=w_pred, b_pred=b_pred[None, :],
                **stacked)


# ----------------------------- pure-JAX reference ---------------------------

def ref_forward(x, edge_index, edge_attr, params):
    src, dst = edge_index[0], edge_index[1]
    h = x @ params["w_in"] + params["b_in"]
    for l in range(NUM_LAYERS):
        h_i, h_j = h[dst], h[src]
        m = jnp.maximum(jnp.concatenate([h_i, h_j], axis=-1) @ params["w1"][l]
                        + edge_attr @ params["w1e"][l] + params["b1"][l], 0.0)
        m = jnp.maximum(m @ params["w2"][l] + params["b2"][l], 0.0)
        aggr = jax.ops.segment_sum(m, dst, num_segments=h.shape[0])
        u = jnp.maximum(jnp.concatenate([h, aggr], axis=-1) @ params["w3"][l]
                        + params["b3"][l], 0.0)
        u = jnp.maximum(u @ params["w4"][l] + params["b4"][l], 0.0)
        h = h + u
    return h @ params["w_pred"] + params["b_pred"]


# ---------------------------------- main ------------------------------------

if __name__ == "__main__":
    key = jax.random.PRNGKey(0)
    k_x, k_ei, k_ea, k_p = jax.random.split(key, 4)

    N_NODES, N_EDGES = 16, 32
    x = jax.random.normal(k_x, (N_NODES, IN_DIM), jnp.float32)
    edge_index = jax.random.randint(k_ei, (2, N_EDGES), 0, N_NODES, jnp.int32)
    edge_attr = jax.random.normal(k_ea, (N_EDGES, EDGE_DIM), jnp.float32)

    params = make_params(k_p)

    out = jax.block_until_ready(mpnn_forward(x, edge_index, edge_attr, params))
    ref = jax.block_until_ready(ref_forward(x, edge_index, edge_attr, params))

    assert out.shape == (N_NODES, OUT_DIM)
    assert jnp.allclose(out, ref, atol=1e-2, rtol=1e-2), \
        float(jnp.max(jnp.abs(out - ref)))

    print("KERNEL_OK")
</pallas_src>

<mosaic_0001>
module attributes {stable_mosaic.version = 11 : i64} {
  func.func @_fused_mpnn_kernel(%arg0: i32, %arg1: memref<16x11xf32, #tpu.memory_space<vmem>>, %arg2: memref<32x16xbf16, #tpu.memory_space<vmem>>, %arg3: memref<32x16xbf16, #tpu.memory_space<vmem>>, %arg4: memref<32x4xf32, #tpu.memory_space<vmem>>, %arg5: memref<11x64xf32, #tpu.memory_space<vmem>>, %arg6: memref<1x64xf32, #tpu.memory_space<vmem>>, %arg7: memref<64x1xf32, #tpu.memory_space<vmem>>, %arg8: memref<1x1xf32, #tpu.memory_space<vmem>>, %arg9: memref<1x128x64xf32, #tpu.memory_space<vmem>>, %arg10: memref<1x4x64xf32, #tpu.memory_space<vmem>>, %arg11: memref<1x1x64xf32, #tpu.memory_space<vmem>>, %arg12: memref<1x64x64xf32, #tpu.memory_space<vmem>>, %arg13: memref<1x1x64xf32, #tpu.memory_space<vmem>>, %arg14: memref<1x128x64xf32, #tpu.memory_space<vmem>>, %arg15: memref<1x1x64xf32, #tpu.memory_space<vmem>>, %arg16: memref<1x64x64xf32, #tpu.memory_space<vmem>>, %arg17: memref<1x1x64xf32, #tpu.memory_space<vmem>>, %arg18: memref<16x1xf32, #tpu.memory_space<vmem>>, %arg19: memref<16x64xf32, #tpu.memory_space<vmem>>) attributes {dimension_semantics = [#tpu.dimension_semantics<arbitrary>], iteration_bounds = array<i64: 4>, scalar_prefetch = 0 : i64, scratch_operands = 1 : i64, tpu.core_type = #tpu.core_type<tc>, window_params = [{pipeline_mode = #tpu.pipeline_mode<synchronous>, transform_indices = @transform_0, window_bounds = array<i64: 16, 11>}, {pipeline_mode = #tpu.pipeline_mode<synchronous>, transform_indices = @transform_1, window_bounds = array<i64: 32, 16>}, {pipeline_mode = #tpu.pipeline_mode<synchronous>, transform_indices = @transform_2, window_bounds = array<i64: 32, 16>}, {pipeline_mode = #tpu.pipeline_mode<synchronous>, transform_indices = @transform_3, window_bounds = array<i64: 32, 4>}, {pipeline_mode = #tpu.pipeline_mode<synchronous>, transform_indices = @transform_4, window_bounds = array<i64: 11, 64>}, {pipeline_mode = #tpu.pipeline_mode<synchronous>, transform_indices = @transform_5, window_bounds = array<i64: 1, 64>}, {pipeline_mode = #tpu.pipeline_mode<synchronous>, transform_indices = @transform_6, window_bounds = array<i64: 64, 1>}, {pipeline_mode = #tpu.pipeline_mode<synchronous>, transform_indices = @transform_7, window_bounds = array<i64: 1, 1>}, {transform_indices = @transform_8, window_bounds = array<i64: 1, 128, 64>}, {transform_indices = @transform_9, window_bounds = array<i64: 1, 4, 64>}, {transform_indices = @transform_10, window_bounds = array<i64: 1, 1, 64>}, {transform_indices = @transform_11, window_bounds = array<i64: 1, 64, 64>}, {transform_indices = @transform_12, window_bounds = array<i64: 1, 1, 64>}, {transform_indices = @transform_13, window_bounds = array<i64: 1, 128, 64>}, {transform_indices = @transform_14, window_bounds = array<i64: 1, 1, 64>}, {transform_indices = @transform_15, window_bounds = array<i64: 1, 64, 64>}, {transform_indices = @transform_16, window_bounds = array<i64: 1, 1, 64>}, {pipeline_mode = #tpu.pipeline_mode<synchronous>, transform_indices = @transform_17, window_bounds = array<i64: 16, 1>}]} {
    %c0_i32 = arith.constant 0 : i32
    %0 = arith.cmpi eq, %arg0, %c0_i32 : i32
    %1 = arith.extui %0 : i1 to i32
    %c0_i32_0 = arith.constant 0 : i32
    %2 = arith.cmpi ne, %1, %c0_i32_0 : i32
    scf.if %2 {
      %c0_49 = arith.constant 0 : index
      %c0_50 = arith.constant 0 : index
      %59 = vector.load %arg1[%c0_49, %c0_50] : memref<16x11xf32, #tpu.memory_space<vmem>>, vector<16x11xf32>
      %c0_51 = arith.constant 0 : index
      %c0_52 = arith.constant 0 : index
      %60 = vector.load %arg5[%c0_51, %c0_52] : memref<11x64xf32, #tpu.memory_space<vmem>>, vector<11x64xf32>
      %cst_53 = arith.constant dense<0.000000e+00> : vector<16x64xf32>
      %61 = tpu.matmul %59, %60, %cst_53 {dimension_numbers = #tpu.dot_dimension_numbers<[1], [0], [0], [1], [0, 0, 1, 1], [], []>} : vector<16x11xf32>, vector<11x64xf32>, vector<16x64xf32> -> vector<16x64xf32>
      %c0_54 = arith.constant 0 : index
      %c0_55 = arith.constant 0 : index
      %62 = vector.load %arg6[%c0_54, %c0_55] : memref<1x64xf32, #tpu.memory_space<vmem>>, vector<1x64xf32>
      %63 = vector.broadcast %62 : vector<1x64xf32> to vector<16x64xf32>
      %64 = arith.addf %61, %63 : vector<16x64xf32>
      %c0_56 = arith.constant 0 : index
      %c0_57 = arith.constant 0 : index
      %65 = vector.load %arg19[%c0_56, %c0_57] : memref<16x64xf32, #tpu.memory_space<vmem>>, vector<16x64xf32>
      tpu.vector_store %arg19[%c0_56, %c0_57], %64 {strides = array<i32>} : memref<16x64xf32, #tpu.memory_space<vmem>>, vector<16x64xf32>,
    } else {
    }
    %c0 = arith.constant 0 : index
    %c0_1 = arith.constant 0 : index
    %3 = vector.load %arg19[%c0, %c0_1] : memref<16x64xf32, #tpu.memory_space<vmem>>, vector<16x64xf32>
    %c0_2 = arith.constant 0 : index
    %c0_3 = arith.constant 0 : index
    %4 = vector.load %arg2[%c0_2, %c0_3] : memref<32x16xbf16, #tpu.memory_space<vmem>>, vector<32x16xbf16>
    %5 = arith.extf %4 : vector<32x16xbf16> to vector<32x16xf32>
    %c0_4 = arith.constant 0 : index
    %c0_5 = arith.constant 0 : index
    %6 = vector.load %arg3[%c0_4, %c0_5] : memref<32x16xbf16, #tpu.memory_space<vmem>>, vector<32x16xbf16>
    %7 = arith.extf %6 : vector<32x16xbf16> to vector<32x16xf32>
    %cst = arith.constant dense<0.000000e+00> : vector<32x64xf32>
    %8 = tpu.matmul %7, %3, %cst {dimension_numbers = #tpu.dot_dimension_numbers<[1], [0], [0], [1], [0, 0, 1, 1], [], []>} : vector<32x16xf32>, vector<16x64xf32>, vector<32x64xf32> -> vector<32x64xf32>
    %cst_6 = arith.constant dense<0.000000e+00> : vector<32x64xf32>
    %9 = tpu.matmul %5, %3, %cst_6 {dimension_numbers = #tpu.dot_dimension_numbers<[1], [0], [0], [1], [0, 0, 1, 1], [], []>} : vector<32x16xf32>, vector<16x64xf32>, vector<32x64xf32> -> vector<32x64xf32>
    %10 = tpu.concatenate %8, %9 in 1 : vector<32x64xf32>, vector<32x64xf32> -> vector<32x128xf32>
    %c0_7 = arith.constant 0 : index
    %c0_8 = arith.constant 0 : index
    %c0_9 = arith.constant 0 : index
    %11 = vector.load %arg9[%c0_7, %c0_8, %c0_9] : memref<1x128x64xf32, #tpu.memory_space<vmem>>, vector<1x128x64xf32>
    %12 = vector.shape_cast %11 : vector<1x128x64xf32> to vector<128x64xf32>
    %cst_10 = arith.constant dense<0.000000e+00> : vector<32x64xf32>
    %13 = tpu.matmul %10, %12, %cst_10 {dimension_numbers = #tpu.dot_dimension_numbers<[1], [0], [0], [1], [0, 0, 1, 1], [], []>} : vector<32x128xf32>, vector<128x64xf32>, vector<32x64xf32> -> vector<32x64xf32>
    %c0_11 = arith.constant 0 : index
    %c0_12 = arith.constant 0 : index
    %14 = vector.load %arg4[%c0_11, %c0_12] : memref<32x4xf32, #tpu.memory_space<vmem>>, vector<32x4xf32>
    %c0_13 = arith.constant 0 : index
    %c0_14 = arith.constant 0 : index
    %c0_15 = arith.constant 0 : index
    %15 = vector.load %arg10[%c0_13, %c0_14, %c0_15] : memref<1x4x64xf32, #tpu.memory_space<vmem>>, vector<1x4x64xf32>
    %16 = vector.shape_cast %15 : vector<1x4x64xf32> to vector<4x64xf32>
    %cst_16 = arith.constant dense<0.000000e+00> : vector<32x64xf32>
    %17 = tpu.matmul %14, %16, %cst_16 {dimension_numbers = #tpu.dot_dimension_numbers<[1], [0], [0], [1], [0, 0, 1, 1], [], []>} : vector<32x4xf32>, vector<4x64xf32>, vector<32x64xf32> -> vector<32x64xf32>
    %18 = arith.addf %13, %17 : vector<32x64xf32>
    %c0_17 = arith.constant 0 : index
    %c0_18 = arith.constant 0 : index
    %c0_19 = arith.constant 0 : index
    %19 = vector.load %arg11[%c0_17, %c0_18, %c0_19] : memref<1x1x64xf32, #tpu.memory_space<vmem>>, vector<1x1x64xf32>
    %20 = vector.shape_cast %19 : vector<1x1x64xf32> to vector<1x64xf32>
    %21 = vector.broadcast %20 : vector<1x64xf32> to vector<32x64xf32>
    %22 = arith.addf %18, %21 : vector<32x64xf32>
    %cst_20 = arith.constant 0.000000e+00 : f32
    %23 = vector.broadcast %cst_20 : f32 to vector<32x64xf32>
    %24 = arith.maximumf %22, %23 : vector<32x64xf32>
    %c0_21 = arith.constant 0 : index
    %c0_22 = arith.constant 0 : index
    %c0_23 = arith.constant 0 : index
    %25 = vector.load %arg12[%c0_21, %c0_22, %c0_23] : memref<1x64x64xf32, #tpu.memory_space<vmem>>, vector<1x64x64xf32>
    %26 = vector.shape_cast %25 : vector<1x64x64xf32> to vector<64x64xf32>
    %cst_24 = arith.constant dense<0.000000e+00> : vector<32x64xf32>
    %27 = tpu.matmul %24, %26, %cst_24 {dimension_numbers = #tpu.dot_dimension_numbers<[1], [0], [0], [1], [0, 0, 1, 1], [], []>} : vector<32x64xf32>, vector<64x64xf32>, vector<32x64xf32> -> vector<32x64xf32>
    %c0_25 = arith.constant 0 : index
    %c0_26 = arith.constant 0 : index
    %c0_27 = arith.constant 0 : index
    %28 = vector.load %arg13[%c0_25, %c0_26, %c0_27] : memref<1x1x64xf32, #tpu.memory_space<vmem>>, vector<1x1x64xf32>
    %29 = vector.shape_cast %28 : vector<1x1x64xf32> to vector<1x64xf32>
    %30 = vector.broadcast %29 : vector<1x64xf32> to vector<32x64xf32>
    %31 = arith.addf %27, %30 : vector<32x64xf32>
    %cst_28 = arith.constant 0.000000e+00 : f32
    %32 = vector.broadcast %cst_28 : f32 to vector<32x64xf32>
    %33 = arith.maximumf %31, %32 : vector<32x64xf32>
    %cst_29 = arith.constant dense<0.000000e+00> : vector<16x64xf32>
    %34 = tpu.matmul %7, %33, %cst_29 {dimension_numbers = #tpu.dot_dimension_numbers<[0], [0], [1], [1], [0, 1, 1, 1], [], []>} : vector<32x16xf32>, vector<32x64xf32>, vector<16x64xf32> -> vector<16x64xf32>
    %35 = tpu.concatenate %3, %34 in 1 : vector<16x64xf32>, vector<16x64xf32> -> vector<16x128xf32>
    %c0_30 = arith.constant 0 : index
    %c0_31 = arith.constant 0 : index
    %c0_32 = arith.constant 0 : index
    %36 = vector.load %arg14[%c0_30, %c0_31, %c0_32] : memref<1x128x64xf32, #tpu.memory_space<vmem>>, vector<1x128x64xf32>
    %37 = vector.shape_cast %36 : vector<1x128x64xf32> to vector<128x64xf32>
    %cst_33 = arith.constant dense<0.000000e+00> : vector<16x64xf32>
    %38 = tpu.matmul %35, %37, %cst_33 {dimension_numbers = #tpu.dot_dimension_numbers<[1], [0], [0], [1], [0, 0, 1, 1], [], []>} : vector<16x128xf32>, vector<128x64xf32>, vector<16x64xf32> -> vector<16x64xf32>
    %c0_34 = arith.constant 0 : index
    %c0_35 = arith.constant 0 : index
    %c0_36 = arith.constant 0 : index
    %39 = vector.load %arg15[%c0_34, %c0_35, %c0_36] : memref<1x1x64xf32, #tpu.memory_space<vmem>>, vector<1x1x64xf32>
    %40 = vector.shape_cast %39 : vector<1x1x64xf32> to vector<1x64xf32>
    %41 = vector.broadcast %40 : vector<1x64xf32> to vector<16x64xf32>
    %42 = arith.addf %38, %41 : vector<16x64xf32>
    %cst_37 = arith.constant 0.000000e+00 : f32
    %43 = vector.broadcast %cst_37 : f32 to vector<16x64xf32>
    %44 = arith.maximumf %42, %43 : vector<16x64xf32>
    %c0_38 = arith.constant 0 : index
    %c0_39 = arith.constant 0 : index
    %c0_40 = arith.constant 0 : index
    %45 = vector.load %arg16[%c0_38, %c0_39, %c0_40] : memref<1x64x64xf32, #tpu.memory_space<vmem>>, vector<1x64x64xf32>
    %46 = vector.shape_cast %45 : vector<1x64x64xf32> to vector<64x64xf32>
    %cst_41 = arith.constant dense<0.000000e+00> : vector<16x64xf32>
    %47 = tpu.matmul %44, %46, %cst_41 {dimension_numbers = #tpu.dot_dimension_numbers<[1], [0], [0], [1], [0, 0, 1, 1], [], []>} : vector<16x64xf32>, vector<64x64xf32>, vector<16x64xf32> -> vector<16x64xf32>
    %c0_42 = arith.constant 0 : index
    %c0_43 = arith.constant 0 : index
    %c0_44 = arith.constant 0 : index
    %48 = vector.load %arg17[%c0_42, %c0_43, %c0_44] : memref<1x1x64xf32, #tpu.memory_space<vmem>>, vector<1x1x64xf32>
    %49 = vector.shape_cast %48 : vector<1x1x64xf32> to vector<1x64xf32>
    %50 = vector.broadcast %49 : vector<1x64xf32> to vector<16x64xf32>
    %51 = arith.addf %47, %50 : vector<16x64xf32>
    %cst_45 = arith.constant 0.000000e+00 : f32
    %52 = vector.broadcast %cst_45 : f32 to vector<16x64xf32>
    %53 = arith.maximumf %51, %52 : vector<16x64xf32>
    %54 = arith.addf %3, %53 : vector<16x64xf32>
    %c0_46 = arith.constant 0 : index
    %c0_47 = arith.constant 0 : index
    %55 = vector.load %arg19[%c0_46, %c0_47] : memref<16x64xf32, #tpu.memory_space<vmem>>, vector<16x64xf32>
    tpu.vector_store %arg19[%c0_46, %c0_47], %54 {strides = array<i32>} : memref<16x64xf32, #tpu.memory_space<vmem>>, vector<16x64xf32>,
    %c3_i32 = arith.constant 3 : i32
    %56 = arith.cmpi eq, %arg0, %c3_i32 : i32
    %57 = arith.extui %56 : i1 to i32
    %c0_i32_48 = arith.constant 0 : i32
    %58 = arith.cmpi ne, %57, %c0_i32_48 : i32
    scf.if %58 {
      %c0_49 = arith.constant 0 : index
      %c0_50 = arith.constant 0 : index
      %59 = vector.load %arg7[%c0_49, %c0_50] : memref<64x1xf32, #tpu.memory_space<vmem>>, vector<64x1xf32>
      %cst_51 = arith.constant dense<0.000000e+00> : vector<16x1xf32>
      %60 = tpu.matmul %54, %59, %cst_51 {dimension_numbers = #tpu.dot_dimension_numbers<[1], [0], [0], [1], [0, 0, 1, 1], [], []>} : vector<16x64xf32>, vector<64x1xf32>, vector<16x1xf32> -> vector<16x1xf32>
      %c0_52 = arith.constant 0 : index
      %c0_53 = arith.constant 0 : index
      %61 = vector.load %arg8[%c0_52, %c0_53] : memref<1x1xf32, #tpu.memory_space<vmem>>, vector<1x1xf32>
      %62 = vector.broadcast %61 : vector<1x1xf32> to vector<16x1xf32>
      %63 = arith.addf %60, %62 : vector<16x1xf32>
      %c0_54 = arith.constant 0 : index
      %c0_55 = arith.constant 0 : index
      %64 = vector.load %arg18[%c0_54, %c0_55] : memref<16x1xf32, #tpu.memory_space<vmem>>, vector<16x1xf32>
      tpu.vector_store %arg18[%c0_54, %c0_55], %63 {strides = array<i32>} : memref<16x1xf32, #tpu.memory_space<vmem>>, vector<16x1xf32>,
    } else {
    }
    return
  }
  func.func @transform_0(%arg0: i32) -> (i32, i32) {
    %c0_i32 = arith.constant 0 : i32
    %c0_i32_0 = arith.constant 0 : i32
    %c0_i32_1 = arith.constant 0 : i32
    return %c0_i32, %c0_i32_0 : i32, i32
  }
  func.func @transform_1(%arg0: i32) -> (i32, i32) {
    %c0_i32 = arith.constant 0 : i32
    %c0_i32_0 = arith.constant 0 : i32
    %c0_i32_1 = arith.constant 0 : i32
    return %c0_i32, %c0_i32_0 : i32, i32
  }
  func.func @transform_2(%arg0: i32) -> (i32, i32) {
    %c0_i32 = arith.constant 0 : i32
    %c0_i32_0 = arith.constant 0 : i32
    %c0_i32_1 = arith.constant 0 : i32
    return %c0_i32, %c0_i32_0 : i32, i32
  }
  func.func @transform_3(%arg0: i32) -> (i32, i32) {
    %c0_i32 = arith.constant 0 : i32
    %c0_i32_0 = arith.constant 0 : i32
    %c0_i32_1 = arith.constant 0 : i32
    return %c0_i32, %c0_i32_0 : i32, i32
  }
  func.func @transform_4(%arg0: i32) -> (i32, i32) {
    %c0_i32 = arith.constant 0 : i32
    %c0_i32_0 = arith.constant 0 : i32
    %c0_i32_1 = arith.constant 0 : i32
    return %c0_i32, %c0_i32_0 : i32, i32
  }
  func.func @transform_5(%arg0: i32) -> (i32, i32) {
    %c0_i32 = arith.constant 0 : i32
    %c0_i32_0 = arith.constant 0 : i32
    %c0_i32_1 = arith.constant 0 : i32
    return %c0_i32, %c0_i32_0 : i32, i32
  }
  func.func @transform_6(%arg0: i32) -> (i32, i32) {
    %c0_i32 = arith.constant 0 : i32
    %c0_i32_0 = arith.constant 0 : i32
    %c0_i32_1 = arith.constant 0 : i32
    return %c0_i32, %c0_i32_0 : i32, i32
  }
  func.func @transform_7(%arg0: i32) -> (i32, i32) {
    %c0_i32 = arith.constant 0 : i32
    %c0_i32_0 = arith.constant 0 : i32
    %c0_i32_1 = arith.constant 0 : i32
    return %c0_i32, %c0_i32_0 : i32, i32
  }
  func.func @transform_8(%arg0: i32) -> (i32, i32, i32) {
    %c0_i32 = arith.constant 0 : i32
    %c0_i32_0 = arith.constant 0 : i32
    %c0_i32_1 = arith.constant 0 : i32
    return %arg0, %c0_i32, %c0_i32_0 : i32, i32, i32
  }
  func.func @transform_9(%arg0: i32) -> (i32, i32, i32) {
    %c0_i32 = arith.constant 0 : i32
    %c0_i32_0 = arith.constant 0 : i32
    %c0_i32_1 = arith.constant 0 : i32
    return %arg0, %c0_i32, %c0_i32_0 : i32, i32, i32
  }
  func.func @transform_10(%arg0: i32) -> (i32, i32, i32) {
    %c0_i32 = arith.constant 0 : i32
    %c0_i32_0 = arith.constant 0 : i32
    %c0_i32_1 = arith.constant 0 : i32
    return %arg0, %c0_i32, %c0_i32_0 : i32, i32, i32
  }
  func.func @transform_11(%arg0: i32) -> (i32, i32, i32) {
    %c0_i32 = arith.constant 0 : i32
    %c0_i32_0 = arith.constant 0 : i32
    %c0_i32_1 = arith.constant 0 : i32
    return %arg0, %c0_i32, %c0_i32_0 : i32, i32, i32
  }
  func.func @transform_12(%arg0: i32) -> (i32, i32, i32) {
    %c0_i32 = arith.constant 0 : i32
    %c0_i32_0 = arith.constant 0 : i32
    %c0_i32_1 = arith.constant 0 : i32
    return %arg0, %c0_i32, %c0_i32_0 : i32, i32, i32
  }
  func.func @transform_13(%arg0: i32) -> (i32, i32, i32) {
    %c0_i32 = arith.constant 0 : i32
    %c0_i32_0 = arith.constant 0 : i32
    %c0_i32_1 = arith.constant 0 : i32
    return %arg0, %c0_i32, %c0_i32_0 : i32, i32, i32
  }
  func.func @transform_14(%arg0: i32) -> (i32, i32, i32) {
    %c0_i32 = arith.constant 0 : i32
    %c0_i32_0 = arith.constant 0 : i32
    %c0_i32_1 = arith.constant 0 : i32
    return %arg0, %c0_i32, %c0_i32_0 : i32, i32, i32
  }
  func.func @transform_15(%arg0: i32) -> (i32, i32, i32) {
    %c0_i32 = arith.constant 0 : i32
    %c0_i32_0 = arith.constant 0 : i32
    %c0_i32_1 = arith.constant 0 : i32
    return %arg0, %c0_i32, %c0_i32_0 : i32, i32, i32
  }
  func.func @transform_16(%arg0: i32) -> (i32, i32, i32) {
    %c0_i32 = arith.constant 0 : i32
    %c0_i32_0 = arith.constant 0 : i32
    %c0_i32_1 = arith.constant 0 : i32
    return %arg0, %c0_i32, %c0_i32_0 : i32, i32, i32
  }
  func.func @transform_17(%arg0: i32) -> (i32, i32) {
    %c0_i32 = arith.constant 0 : i32
    %c0_i32_0 = arith.constant 0 : i32
    %c0_i32_1 = arith.constant 0 : i32
    return %c0_i32, %c0_i32_0 : i32, i32
  }
}

</mosaic_0001>

<llo_original>
// kernel: tpu_custom_call.1
$region0: #{tpu_custom_call.1}
  #allocation0 [shape = 'u32[]', space=smem, size = 0x4, offset = 0x4, fixed_abs, tag = 'smem constant byte address 0x4 - core index']
  #allocation1 [shape = 'u32[72,128]{1,0:T(1,128)}', space=vmem, size = 0x9000, scoped, tag = 'internal scratch']
  #allocation2 [shape = 'f32[16,64]{1,0:T(8,128)}', space=vmem, size = 0x2000, scoped, tag = 'scratch operand']
  #allocation3 [shape = 'f32[1,1]{1,0:T(1,128)S(1)}', space=vmem, size = 0x200, scoped, tag = 'scoped memory for tpu_custom_call.1']
  %s0 = inlined_call_operand.vmem [shape: f32[16,11], index: 0, kind: input, shape index: {}]
  %s1 = inlined_call_operand.vmem [shape: bf16[32,16], index: 1, kind: input, shape index: {}]
  %s2 = inlined_call_operand.vmem [shape: bf16[32,16], index: 2, kind: input, shape index: {}]
  %s3 = inlined_call_operand.vmem [shape: f32[32,4], index: 3, kind: input, shape index: {}]
  %s4 = inlined_call_operand.vmem [shape: f32[11,64], index: 4, kind: input, shape index: {}]
  %s5 = inlined_call_operand.vmem [shape: f32[1,64], index: 5, kind: input, shape index: {}]
  %s6 = inlined_call_operand.vmem [shape: f32[64,1], index: 6, kind: input, shape index: {}]
  %s7 = inlined_call_operand.<no memory space> [shape: f32[1,1], index: 7, kind: input, shape index: {}]
  %s8 = inlined_call_operand.vmem [shape: f32[4,128,64], index: 8, kind: input, shape index: {}]
  %s9 = inlined_call_operand.vmem [shape: f32[4,4,64], index: 9, kind: input, shape index: {}]
  %s10 = inlined_call_operand.vmem [shape: f32[4,1,64], index: 10, kind: input, shape index: {}]
  %s11 = inlined_call_operand.vmem [shape: f32[4,64,64], index: 11, kind: input, shape index: {}]
  %s12 = inlined_call_operand.vmem [shape: f32[4,1,64], index: 12, kind: input, shape index: {}]
  %s13 = inlined_call_operand.vmem [shape: f32[4,128,64], index: 13, kind: input, shape index: {}]
  %s14 = inlined_call_operand.vmem [shape: f32[4,1,64], index: 14, kind: input, shape index: {}]
  %s15 = inlined_call_operand.vmem [shape: f32[4,64,64], index: 15, kind: input, shape index: {}]
  %s16 = inlined_call_operand.vmem [shape: f32[4,1,64], index: 16, kind: input, shape index: {}]
  %s17 = inlined_call_operand.vmem [shape: f32[16,1], index: 17, kind: output, shape index: {}]
  %s18 = sld [smem:[#allocation0]]
  $region109: #{tpu_custom_call.1} parent=0
    _
  %s20 = ssub.s32 1, %s18
  %s21 = scalar_select 0, %s20, %s18
  %v22 = vstv %s7
  %23 = vst [vmem:[#allocation3] sm:$0x1] %v22
  loop: start=0, step=1, limit=6
  $region2: #{tpu_custom_call.1} parent=0 // loop_pre_header
    _
  $region3: #{tpu_custom_call.1} parent=0 // loop_header
    %s25 = sphi 0, %s29
    %p26 = scmp.ge.s32.totalorder %s25, 6
    %s33 = sphi 0, %s33
    %s35 = sphi 0, %s33
    %s36 = sphi 0, %s35
    %s50 = sphi 0, %s36
    %s54 = sphi 0, %s54
    %s56 = sphi 0, %s54
    %s57 = sphi 0, %s56
    %s71 = sphi 0, %s57
    %s75 = sphi 0, %s75
    %s77 = sphi 0, %s75
    %s78 = sphi 0, %s77
    %s92 = sphi 0, %s78
    %s96 = sphi 0, %s96
    %s98 = sphi 0, %s96
    %s99 = sphi 0, %s98
    %s113 = sphi 0, %s99
    %s117 = sphi 0, %s117
    %s119 = sphi 0, %s117
    %s120 = sphi 0, %s119
    %s134 = sphi 0, %s120
    %s138 = sphi 0, %s138
    %s140 = sphi 0, %s138
    %s141 = sphi 0, %s140
    %s155 = sphi 0, %s141
    %s159 = sphi 0, %s159
    %s161 = sphi 0, %s159
    %s162 = sphi 0, %s161
    %s176 = sphi 0, %s162
    %s180 = sphi 0, %s180
    %s182 = sphi 0, %s180
    %s183 = sphi 0, %s182
    %s197 = sphi 0, %s183
    %s203 = sphi 0, %s205
    %s206 = sphi 0, %s203
    %s207 = sphi 0, %s206
    %s223 = sphi 0, %s207
    %s229 = sphi 0, %s231
    %s232 = sphi 0, %s229
    %s233 = sphi 0, %s232
    %s249 = sphi 0, %s233
    %s255 = sphi 0, %s257
    %s258 = sphi 0, %s255
    %s259 = sphi 0, %s258
    %s275 = sphi 0, %s259
    %s281 = sphi 0, %s283
    %s284 = sphi 0, %s281
    %s285 = sphi 0, %s284
    %s301 = sphi 0, %s285
    %s307 = sphi 0, %s309
    %s310 = sphi 0, %s307
    %s311 = sphi 0, %s310
    %s327 = sphi 0, %s311
    %s333 = sphi 0, %s335
    %s336 = sphi 0, %s333
    %s337 = sphi 0, %s336
    %s353 = sphi 0, %s337
    %s359 = sphi 0, %s361
    %s362 = sphi 0, %s359
    %s363 = sphi 0, %s362
    %s379 = sphi 0, %s363
    %s385 = sphi 0, %s387
    %s388 = sphi 0, %s385
    %s389 = sphi 0, %s388
    %s405 = sphi 0, %s389
    %s411 = sphi 0, %s413
    %s414 = sphi 0, %s411
    %s415 = sphi 0, %s414
    %s431 = sphi 0, %s415
    %s435 = sphi 0, %s435
    %s437 = sphi 0, %s435
    %s438 = sphi 0, %s437
    %s452 = sphi 0, %s438
  $region4: #{tpu_custom_call.1} parent=0 // loop_header_branch
    %28 = sbr.rel (%p26) target = $region8
  $region5: #{tpu_custom_call.1} parent=0 // loop_body
    %s30 = ssub.s32 %s25, 1
    %s31 = ssub.s32 %s25, 2
    %s32 = sadd.s32 %s25, 1
    %s34 = sadd.s32 %s33, 1
    %p37 = scmp.eq.s32.totalorder %s25, 3
    %p38 = scmp.ne.s32.totalorder %s33, %s35
    %p39 = scmp.eq.s32.totalorder %s25, 0
    %p40 = por %p38, %p39
    %p41 = scmp.ne.s32.totalorder %s33, %s35
    %p42 = scmp.eq.s32.totalorder %s30, 3
    %p43 = por %p41, %p42
    %p44 = scmp.ne.s32.totalorder %s35, %s36
    %p45 = scmp.eq.s32.totalorder %s30, 0
    %p46 = por %p44, %p45
    %p47 = scmp.ne.s32.totalorder %s35, %s36
    %p48 = scmp.eq.s32.totalorder %s31, 3
    %p49 = por %p47, %p48
    %p51 = scmp.ne.s32.totalorder %s36, %s50
    %p52 = scmp.eq.s32.totalorder %s31, 0
    %p53 = por %p51, %p52
    %s55 = sadd.s32 %s54, 1
    %p58 = scmp.eq.s32.totalorder %s25, 3
    %p59 = scmp.ne.s32.totalorder %s54, %s56
    %p60 = scmp.eq.s32.totalorder %s25, 0
    %p61 = por %p59, %p60
    %p62 = scmp.ne.s32.totalorder %s54, %s56
    %p63 = scmp.eq.s32.totalorder %s30, 3
    %p64 = por %p62, %p63
    %p65 = scmp.ne.s32.totalorder %s56, %s57
    %p66 = scmp.eq.s32.totalorder %s30, 0
    %p67 = por %p65, %p66
    %p68 = scmp.ne.s32.totalorder %s56, %s57
    %p69 = scmp.eq.s32.totalorder %s31, 3
    %p70 = por %p68, %p69
    %p72 = scmp.ne.s32.totalorder %s57, %s71
    %p73 = scmp.eq.s32.totalorder %s31, 0
    %p74 = por %p72, %p73
    %s76 = sadd.s32 %s75, 1
    %p79 = scmp.eq.s32.totalorder %s25, 3
    %p80 = scmp.ne.s32.totalorder %s75, %s77
    %p81 = scmp.eq.s32.totalorder %s25, 0
    %p82 = por %p80, %p81
    %p83 = scmp.ne.s32.totalorder %s75, %s77
    %p84 = scmp.eq.s32.totalorder %s30, 3
    %p85 = por %p83, %p84
    %p86 = scmp.ne.s32.totalorder %s77, %s78
    %p87 = scmp.eq.s32.totalorder %s30, 0
    %p88 = por %p86, %p87
    %p89 = scmp.ne.s32.totalorder %s77, %s78
    %p90 = scmp.eq.s32.totalorder %s31, 3
    %p91 = por %p89, %p90
    %p93 = scmp.ne.s32.totalorder %s78, %s92
    %p94 = scmp.eq.s32.totalorder %s31, 0
    %p95 = por %p93, %p94
    %s97 = sadd.s32 %s96, 1
    %p100 = scmp.eq.s32.totalorder %s25, 3
    %p101 = scmp.ne.s32.totalorder %s96, %s98
    %p102 = scmp.eq.s32.totalorder %s25, 0
    %p103 = por %p101, %p102
    %p104 = scmp.ne.s32.totalorder %s96, %s98
    %p105 = scmp.eq.s32.totalorder %s30, 3
    %p106 = por %p104, %p105
    %p107 = scmp.ne.s32.totalorder %s98, %s99
    %p108 = scmp.eq.s32.totalorder %s30, 0
    %p109 = por %p107, %p108
    %p110 = scmp.ne.s32.totalorder %s98, %s99
    %p111 = scmp.eq.s32.totalorder %s31, 3
    %p112 = por %p110, %p111
    %p114 = scmp.ne.s32.totalorder %s99, %s113
    %p115 = scmp.eq.s32.totalorder %s31, 0
    %p116 = por %p114, %p115
    %s118 = sadd.s32 %s117, 1
    %p121 = scmp.eq.s32.totalorder %s25, 3
    %p122 = scmp.ne.s32.totalorder %s117, %s119
    %p123 = scmp.eq.s32.totalorder %s25, 0
    %p124 = por %p122, %p123
    %p125 = scmp.ne.s32.totalorder %s117, %s119
    %p126 = scmp.eq.s32.totalorder %s30, 3
    %p127 = por %p125, %p126
    %p128 = scmp.ne.s32.totalorder %s119, %s120
    %p129 = scmp.eq.s32.totalorder %s30, 0
    %p130 = por %p128, %p129
    %p131 = scmp.ne.s32.totalorder %s119, %s120
    %p132 = scmp.eq.s32.totalorder %s31, 3
    %p133 = por %p131, %p132
    %p135 = scmp.ne.s32.totalorder %s120, %s134
    %p136 = scmp.eq.s32.totalorder %s31, 0
    %p137 = por %p135, %p136
    %s139 = sadd.s32 %s138, 1
    %p142 = scmp.eq.s32.totalorder %s25, 3
    %p143 = scmp.ne.s32.totalorder %s138, %s140
    %p144 = scmp.eq.s32.totalorder %s25, 0
    %p145 = por %p143, %p144
    %p146 = scmp.ne.s32.totalorder %s138, %s140
    %p147 = scmp.eq.s32.totalorder %s30, 3
    %p148 = por %p146, %p147
    %p149 = scmp.ne.s32.totalorder %s140, %s141
    %p150 = scmp.eq.s32.totalorder %s30, 0
    %p151 = por %p149, %p150
    %p152 = scmp.ne.s32.totalorder %s140, %s141
    %p153 = scmp.eq.s32.totalorder %s31, 3
    %p154 = por %p152, %p153
    %p156 = scmp.ne.s32.totalorder %s141, %s155
    %p157 = scmp.eq.s32.totalorder %s31, 0
    %p158 = por %p156, %p157
    %s160 = sadd.s32 %s159, 1
    %p163 = scmp.eq.s32.totalorder %s25, 3
    %p164 = scmp.ne.s32.totalorder %s159, %s161
    %p165 = scmp.eq.s32.totalorder %s25, 0
    %p166 = por %p164, %p165
    %p167 = scmp.ne.s32.totalorder %s159, %s161
    %p168 = scmp.eq.s32.totalorder %s30, 3
    %p169 = por %p167, %p168
    %p170 = scmp.ne.s32.totalorder %s161, %s162
    %p171 = scmp.eq.s32.totalorder %s30, 0
    %p172 = por %p170, %p171
    %p173 = scmp.ne.s32.totalorder %s161, %s162
    %p174 = scmp.eq.s32.totalorder %s31, 3
    %p175 = por %p173, %p174
    %p177 = scmp.ne.s32.totalorder %s162, %s176
    %p178 = scmp.eq.s32.totalorder %s31, 0
    %p179 = por %p177, %p178
    %s181 = sadd.s32 %s180, 1
    %p184 = scmp.eq.s32.totalorder %s25, 3
    %p185 = scmp.ne.s32.totalorder %s180, %s182
    %p186 = scmp.eq.s32.totalorder %s25, 0
    %p187 = por %p185, %p186
    %p188 = scmp.ne.s32.totalorder %s180, %s182
    %p189 = scmp.eq.s32.totalorder %s30, 3
    %p190 = por %p188, %p189
    %p191 = scmp.ne.s32.totalorder %s182, %s183
    %p192 = scmp.eq.s32.totalorder %s30, 0
    %p193 = por %p191, %p192
    %p194 = scmp.ne.s32.totalorder %s182, %s183
    %p195 = scmp.eq.s32.totalorder %s31, 3
    %p196 = por %p194, %p195
    %p198 = scmp.ne.s32.totalorder %s183, %s197
    %p199 = scmp.eq.s32.totalorder %s31, 0
    %p200 = por %p198, %p199
    %s201 = ssub.s32 %s25, %s32
    %p202 = scmp.eq.s32.totalorder %s201, 0
    %s204 = sadd.s32 %s203, 1
    %s205 = scalar_select %p202, %s203, %s204
    %p208 = pneg %p202
    %p209 = scmp.eq.s32.totalorder %s25, 3
    %p210 = por %p208, %p209
    %p211 = scmp.ne.s32.totalorder %s203, %s206
    %p212 = scmp.eq.s32.totalorder %s25, 0
    %p213 = por %p211, %p212
    %p214 = scmp.ne.s32.totalorder %s203, %s206
    %p215 = scmp.eq.s32.totalorder %s30, 3
    %p216 = por %p214, %p215
    %p217 = scmp.ne.s32.totalorder %s206, %s207
    %p218 = scmp.eq.s32.totalorder %s30, 0
    %p219 = por %p217, %p218
    %p220 = scmp.ne.s32.totalorder %s206, %s207
    %p221 = scmp.eq.s32.totalorder %s31, 3
    %p222 = por %p220, %p221
    %p224 = scmp.ne.s32.totalorder %s207, %s223
    %p225 = scmp.eq.s32.totalorder %s31, 0
    %p226 = por %p224, %p225
    %s227 = ssub.s32 %s25, %s32
    %p228 = scmp.eq.s32.totalorder %s227, 0
    %s230 = sadd.s32 %s229, 1
    %s231 = scalar_select %p228, %s229, %s230
    %p234 = pneg %p228
    %p235 = scmp.eq.s32.totalorder %s25, 3
    %p236 = por %p234, %p235
    %p237 = scmp.ne.s32.totalorder %s229, %s232
    %p238 = scmp.eq.s32.totalorder %s25, 0
    %p239 = por %p237, %p238
    %p240 = scmp.ne.s32.totalorder %s229, %s232
    %p241 = scmp.eq.s32.totalorder %s30, 3
    %p242 = por %p240, %p241
    %p243 = scmp.ne.s32.totalorder %s232, %s233
    %p244 = scmp.eq.s32.totalorder %s30, 0
    %p245 = por %p243, %p244
    %p246 = scmp.ne.s32.totalorder %s232, %s233
    %p247 = scmp.eq.s32.totalorder %s31, 3
    %p248 = por %p246, %p247
    %p250 = scmp.ne.s32.totalorder %s233, %s249
    %p251 = scmp.eq.s32.totalorder %s31, 0
    %p252 = por %p250, %p251
    %s253 = ssub.s32 %s25, %s32
    %p254 = scmp.eq.s32.totalorder %s253, 0
    %s256 = sadd.s32 %s255, 1
    %s257 = scalar_select %p254, %s255, %s256
    %p260 = pneg %p254
    %p261 = scmp.eq.s32.totalorder %s25, 3
    %p262 = por %p260, %p261
    %p263 = scmp.ne.s32.totalorder %s255, %s258
    %p264 = scmp.eq.s32.totalorder %s25, 0
    %p265 = por %p263, %p264
    %p266 = scmp.ne.s32.totalorder %s255, %s258
    %p267 = scmp.eq.s32.totalorder %s30, 3
    %p268 = por %p266, %p267
    %p269 = scmp.ne.s32.totalorder %s258, %s259
    %p270 = scmp.eq.s32.totalorder %s30, 0
    %p271 = por %p269, %p270
    %p272 = scmp.ne.s32.totalorder %s258, %s259
    %p273 = scmp.eq.s32.totalorder %s31, 3
    %p274 = por %p272, %p273
    %p276 = scmp.ne.s32.totalorder %s259, %s275
    %p277 = scmp.eq.s32.totalorder %s31, 0
    %p278 = por %p276, %p277
    %s279 = ssub.s32 %s25, %s32
    %p280 = scmp.eq.s32.totalorder %s279, 0
    %s282 = sadd.s32 %s281, 1
    %s283 = scalar_select %p280, %s281, %s282
    %p286 = pneg %p280
    %p287 = scmp.eq.s32.totalorder %s25, 3
    %p288 = por %p286, %p287
    %p289 = scmp.ne.s32.totalorder %s281, %s284
    %p290 = scmp.eq.s32.totalorder %s25, 0
    %p291 = por %p289, %p290
    %p292 = scmp.ne.s32.totalorder %s281, %s284
    %p293 = scmp.eq.s32.totalorder %s30, 3
    %p294 = por %p292, %p293
    %p295 = scmp.ne.s32.totalorder %s284, %s285
    %p296 = scmp.eq.s32.totalorder %s30, 0
    %p297 = por %p295, %p296
    %p298 = scmp.ne.s32.totalorder %s284, %s285
    %p299 = scmp.eq.s32.totalorder %s31, 3
    %p300 = por %p298, %p299
    %p302 = scmp.ne.s32.totalorder %s285, %s301
    %p303 = scmp.eq.s32.totalorder %s31, 0
    %p304 = por %p302, %p303
    %s305 = ssub.s32 %s25, %s32
    %p306 = scmp.eq.s32.totalorder %s305, 0
    %s308 = sadd.s32 %s307, 1
    %s309 = scalar_select %p306, %s307, %s308
    %p312 = pneg %p306
    %p313 = scmp.eq.s32.totalorder %s25, 3
    %p314 = por %p312, %p313
    %p315 = scmp.ne.s32.totalorder %s307, %s310
    %p316 = scmp.eq.s32.totalorder %s25, 0
    %p317 = por %p315, %p316
    %p318 = scmp.ne.s32.totalorder %s307, %s310
    %p319 = scmp.eq.s32.totalorder %s30, 3
    %p320 = por %p318, %p319
    %p321 = scmp.ne.s32.totalorder %s310, %s311
    %p322 = scmp.eq.s32.totalorder %s30, 0
    %p323 = por %p321, %p322
    %p324 = scmp.ne.s32.totalorder %s310, %s311
    %p325 = scmp.eq.s32.totalorder %s31, 3
    %p326 = por %p324, %p325
    %p328 = scmp.ne.s32.totalorder %s311, %s327
    %p329 = scmp.eq.s32.totalorder %s31, 0
    %p330 = por %p328, %p329
    %s331 = ssub.s32 %s25, %s32
    %p332 = scmp.eq.s32.totalorder %s331, 0
    %s334 = sadd.s32 %s333, 1
    %s335 = scalar_select %p332, %s333, %s334
    %p338 = pneg %p332
    %p339 = scmp.eq.s32.totalorder %s25, 3
    %p340 = por %p338, %p339
    %p341 = scmp.ne.s32.totalorder %s333, %s336
    %p342 = scmp.eq.s32.totalorder %s25, 0
    %p343 = por %p341, %p342
    %p344 = scmp.ne.s32.totalorder %s333, %s336
    %p345 = scmp.eq.s32.totalorder %s30, 3
    %p346 = por %p344, %p345
    %p347 = scmp.ne.s32.totalorder %s336, %s337
    %p348 = scmp.eq.s32.totalorder %s30, 0
    %p349 = por %p347, %p348
    %p350 = scmp.ne.s32.totalorder %s336, %s337
    %p351 = scmp.eq.s32.totalorder %s31, 3
    %p352 = por %p350, %p351
    %p354 = scmp.ne.s32.totalorder %s337, %s353
    %p355 = scmp.eq.s32.totalorder %s31, 0
    %p356 = por %p354, %p355
    %s357 = ssub.s32 %s25, %s32
    %p358 = scmp.eq.s32.totalorder %s357, 0
    %s360 = sadd.s32 %s359, 1
    %s361 = scalar_select %p358, %s359, %s360
    %p364 = pneg %p358
    %p365 = scmp.eq.s32.totalorder %s25, 3
    %p366 = por %p364, %p365
    %p367 = scmp.ne.s32.totalorder %s359, %s362
    %p368 = scmp.eq.s32.totalorder %s25, 0
    %p369 = por %p367, %p368
    %p370 = scmp.ne.s32.totalorder %s359, %s362
    %p371 = scmp.eq.s32.totalorder %s30, 3
    %p372 = por %p370, %p371
    %p373 = scmp.ne.s32.totalorder %s362, %s363
    %p374 = scmp.eq.s32.totalorder %s30, 0
    %p375 = por %p373, %p374
    %p376 = scmp.ne.s32.totalorder %s362, %s363
    %p377 = scmp.eq.s32.totalorder %s31, 3
    %p378 = por %p376, %p377
    %p380 = scmp.ne.s32.totalorder %s363, %s379
    %p381 = scmp.eq.s32.totalorder %s31, 0
    %p382 = por %p380, %p381
    %s383 = ssub.s32 %s25, %s32
    %p384 = scmp.eq.s32.totalorder %s383, 0
    %s386 = sadd.s32 %s385, 1
    %s387 = scalar_select %p384, %s385, %s386
    %p390 = pneg %p384
    %p391 = scmp.eq.s32.totalorder %s25, 3
    %p392 = por %p390, %p391
    %p393 = scmp.ne.s32.totalorder %s385, %s388
    %p394 = scmp.eq.s32.totalorder %s25, 0
    %p395 = por %p393, %p394
    %p396 = scmp.ne.s32.totalorder %s385, %s388
    %p397 = scmp.eq.s32.totalorder %s30, 3
    %p398 = por %p396, %p397
    %p399 = scmp.ne.s32.totalorder %s388, %s389
    %p400 = scmp.eq.s32.totalorder %s30, 0
    %p401 = por %p399, %p400
    %p402 = scmp.ne.s32.totalorder %s388, %s389
    %p403 = scmp.eq.s32.totalorder %s31, 3
    %p404 = por %p402, %p403
    %p406 = scmp.ne.s32.totalorder %s389, %s405
    %p407 = scmp.eq.s32.totalorder %s31, 0
    %p408 = por %p406, %p407
    %s409 = ssub.s32 %s25, %s32
    %p410 = scmp.eq.s32.totalorder %s409, 0
    %s412 = sadd.s32 %s411, 1
    %s413 = scalar_select %p410, %s411, %s412
    %p416 = pneg %p410
    %p417 = scmp.eq.s32.totalorder %s25, 3
    %p418 = por %p416, %p417
    %p419 = scmp.ne.s32.totalorder %s411, %s414
    %p420 = scmp.eq.s32.totalorder %s25, 0
    %p421 = por %p419, %p420
    %p422 = scmp.ne.s32.totalorder %s411, %s414
    %p423 = scmp.eq.s32.totalorder %s30, 3
    %p424 = por %p422, %p423
    %p425 = scmp.ne.s32.totalorder %s414, %s415
    %p426 = scmp.eq.s32.totalorder %s30, 0
    %p427 = por %p425, %p426
    %p428 = scmp.ne.s32.totalorder %s414, %s415
    %p429 = scmp.eq.s32.totalorder %s31, 3
    %p430 = por %p428, %p429
    %p432 = scmp.ne.s32.totalorder %s415, %s431
    %p433 = scmp.eq.s32.totalorder %s31, 0
    %p434 = por %p432, %p433
    %s436 = sadd.s32 %s435, 1
    %p439 = scmp.eq.s32.totalorder %s25, 3
    %p440 = scmp.ne.s32.totalorder %s435, %s437
    %p441 = scmp.eq.s32.totalorder %s25, 0
    %p442 = por %p440, %p441
    %p443 = scmp.ne.s32.totalorder %s435, %s437
    %p444 = scmp.eq.s32.totalorder %s30, 3
    %p445 = por %p443, %p444
    %p446 = scmp.ne.s32.totalorder %s437, %s438
    %p447 = scmp.eq.s32.totalorder %s30, 0
    %p448 = por %p446, %p447
    %p449 = scmp.ne.s32.totalorder %s437, %s438
    %p450 = scmp.eq.s32.totalorder %s31, 3
    %p451 = por %p449, %p450
    %p453 = scmp.ne.s32.totalorder %s438, %s452
    %p454 = scmp.eq.s32.totalorder %s31, 0
    %p455 = por %p453, %p454
    %p456 = scmp.le.s32.totalorder 1, %s25
    %p457 = scmp.lt.s32.totalorder %s25, 5
    %p458 = pnand %p456, %p457
    %p459 = pneg %p458
    // Predicated region
    $region9: #{tpu_custom_call.1} parent=5 // pred_check
      _
    $region10: #{tpu_custom_call.1} parent=5 // pred_check_branch
      %461 = sbr.rel (%p458) target = $region12
    $region11: #{tpu_custom_call.1} parent=5 // pred_region
      %s462 = ssub.s32 %s25, 1
      // Predicated region
      $region13: #{tpu_custom_call.1} parent=11 // pred_check
        %p463 = pneg %p46
      $region14: #{tpu_custom_call.1} parent=11 // pred_check_branch
        %465 = sbr.rel (%p463) target = $region16
      $region15: #{tpu_custom_call.1} parent=11 // pred_region
        _
      $region16: #{tpu_custom_call.1} parent=11 // pred_fallthru
        _
      // Predicated region
      $region17: #{tpu_custom_call.1} parent=11 // pred_check
        %p466 = pneg %p67
      $region18: #{tpu_custom_call.1} parent=11 // pred_check_branch
        %468 = sbr.rel (%p466) target = $region20
      $region19: #{tpu_custom_call.1} parent=11 // pred_region
        _
      $region20: #{tpu_custom_call.1} parent=11 // pred_fallthru
        _
      // Predicated region
      $region21: #{tpu_custom_call.1} parent=11 // pred_check
        %p469 = pneg %p88
      $region22: #{tpu_custom_call.1} parent=11 // pred_check_branch
        %471 = sbr.rel (%p469) target = $region24
      $region23: #{tpu_custom_call.1} parent=11 // pred_region
        _
      $region24: #{tpu_custom_call.1} parent=11 // pred_fallthru
        _
      // Predicated region
      $region25: #{tpu_custom_call.1} parent=11 // pred_check
        %p472 = pneg %p109
      $region26: #{tpu_custom_call.1} parent=11 // pred_check_branch
        %474 = sbr.rel (%p472) target = $region28
      $region27: #{tpu_custom_call.1} parent=11 // pred_region
        _
      $region28: #{tpu_custom_call.1} parent=11 // pred_fallthru
        _
      // Predicated region
      $region29: #{tpu_custom_call.1} parent=11 // pred_check
        %p475 = pneg %p130
      $region30: #{tpu_custom_call.1} parent=11 // pred_check_branch
        %477 = sbr.rel (%p475) target = $region32
      $region31: #{tpu_custom_call.1} parent=11 // pred_region
        _
      $region32: #{tpu_custom_call.1} parent=11 // pred_fallthru
        _
      // Predicated region
      $region33: #{tpu_custom_call.1} parent=11 // pred_check
        %p478 = pneg %p151
      $region34: #{tpu_custom_call.1} parent=11 // pred_check_branch
        %480 = sbr.rel (%p478) target = $region36
      $region35: #{tpu_custom_call.1} parent=11 // pred_region
        _
      $region36: #{tpu_custom_call.1} parent=11 // pred_fallthru
        _
      // Predicated region
      $region37: #{tpu_custom_call.1} parent=11 // pred_check
        %p481 = pneg %p172
      $region38: #{tpu_custom_call.1} parent=11 // pred_check_branch
        %483 = sbr.rel (%p481) target = $region40
      $region39: #{tpu_custom_call.1} parent=11 // pred_region
        _
      $region40: #{tpu_custom_call.1} parent=11 // pred_fallthru
        _
      // Predicated region
      $region41: #{tpu_custom_call.1} parent=11 // pred_check
        %p484 = pneg %p193
      $region42: #{tpu_custom_call.1} parent=11 // pred_check_branch
        %486 = sbr.rel (%p484) target = $region44
      $region43: #{tpu_custom_call.1} parent=11 // pred_region
        _
      $region44: #{tpu_custom_call.1} parent=11 // pred_fallthru
        _
    $region12: #{tpu_custom_call.1} parent=5 // pred_fallthru
      _
    %p487 = scmp.lt.s32.totalorder %s25, 4
    // Predicated region
    $region45: #{tpu_custom_call.1} parent=5 // pred_check
      %p488 = pneg %p487
    $region46: #{tpu_custom_call.1} parent=5 // pred_check_branch
      %490 = sbr.rel (%p488) target = $region48
    $region47: #{tpu_custom_call.1} parent=5 // pred_region
      // Predicated region
      $region49: #{tpu_custom_call.1} parent=47 // pred_check
        %p491 = pneg %p213
      $region50: #{tpu_custom_call.1} parent=47 // pred_check_branch
        %493 = sbr.rel (%p491) target = $region52
      $region51: #{tpu_custom_call.1} parent=47 // pred_region
        %p494 = scmp.lt.s32.totalorder %s25, 3
        %s495 = scalar_select %p494, %s25, 3
        %s496 = smul.addr %s495, 16
        %s497 = smul.addr %s496, 8
        %s498 = scalar_lea.vmem %s8, %s497
      $region52: #{tpu_custom_call.1} parent=47 // pred_fallthru
        _
      // Predicated region
      $region53: #{tpu_custom_call.1} parent=47 // pred_check
        %p499 = pneg %p239
      $region54: #{tpu_custom_call.1} parent=47 // pred_check_branch
        %501 = sbr.rel (%p499) target = $region56
      $region55: #{tpu_custom_call.1} parent=47 // pred_region
        %p502 = scmp.lt.s32.totalorder %s25, 3
        %s503 = scalar_select %p502, %s25, 3
        %s504 = smul.addr %s503, 4
        %s505 = scalar_lea.vmem %s9, %s504
      $region56: #{tpu_custom_call.1} parent=47 // pred_fallthru
        _
      // Predicated region
      $region57: #{tpu_custom_call.1} parent=47 // pred_check
        %p506 = pneg %p265
      $region58: #{tpu_custom_call.1} parent=47 // pred_check_branch
        %508 = sbr.rel (%p506) target = $region60
      $region59: #{tpu_custom_call.1} parent=47 // pred_region
        %p509 = scmp.lt.s32.totalorder %s25, 3
        %s510 = scalar_select %p509, %s25, 3
        %s511 = scalar_lea.vmem %s10, %s510
      $region60: #{tpu_custom_call.1} parent=47 // pred_fallthru
        _
      // Predicated region
      $region61: #{tpu_custom_call.1} parent=47 // pred_check
        %p512 = pneg %p291
      $region62: #{tpu_custom_call.1} parent=47 // pred_check_branch
        %514 = sbr.rel (%p512) target = $region64
      $region63: #{tpu_custom_call.1} parent=47 // pred_region
        %p515 = scmp.lt.s32.totalorder %s25, 3
        %s516 = scalar_select %p515, %s25, 3
        %s517 = smul.addr %s516, 8
        %s518 = smul.addr %s517, 8
        %s519 = scalar_lea.vmem %s11, %s518
      $region64: #{tpu_custom_call.1} parent=47 // pred_fallthru
        _
      // Predicated region
      $region65: #{tpu_custom_call.1} parent=47 // pred_check
        %p520 = pneg %p317
      $region66: #{tpu_custom_call.1} parent=47 // pred_check_branch
        %522 = sbr.rel (%p520) target = $region68
      $region67: #{tpu_custom_call.1} parent=47 // pred_region
        %p523 = scmp.lt.s32.totalorder %s25, 3
        %s524 = scalar_select %p523, %s25, 3
        %s525 = scalar_lea.vmem %s12, %s524
      $region68: #{tpu_custom_call.1} parent=47 // pred_fallthru
        _
      // Predicated region
      $region69: #{tpu_custom_call.1} parent=47 // pred_check
        %p526 = pneg %p343
      $region70: #{tpu_custom_call.1} parent=47 // pred_check_branch
        %528 = sbr.rel (%p526) target = $region72
      $region71: #{tpu_custom_call.1} parent=47 // pred_region
        %p529 = scmp.lt.s32.totalorder %s25, 3
        %s530 = scalar_select %p529, %s25, 3
        %s531 = smul.addr %s530, 16
        %s532 = smul.addr %s531, 8
        %s533 = scalar_lea.vmem %s13, %s532
      $region72: #{tpu_custom_call.1} parent=47 // pred_fallthru
        _
      // Predicated region
      $region73: #{tpu_custom_call.1} parent=47 // pred_check
        %p534 = pneg %p369
      $region74: #{tpu_custom_call.1} parent=47 // pred_check_branch
        %536 = sbr.rel (%p534) target = $region76
      $region75: #{tpu_custom_call.1} parent=47 // pred_region
        %p537 = scmp.lt.s32.totalorder %s25, 3
        %s538 = scalar_select %p537, %s25, 3
        %s539 = scalar_lea.vmem %s14, %s538
      $region76: #{tpu_custom_call.1} parent=47 // pred_fallthru
        _
      // Predicated region
      $region77: #{tpu_custom_call.1} parent=47 // pred_check
        %p540 = pneg %p395
      $region78: #{tpu_custom_call.1} parent=47 // pred_check_branch
        %542 = sbr.rel (%p540) target = $region80
      $region79: #{tpu_custom_call.1} parent=47 // pred_region
        %p543 = scmp.lt.s32.totalorder %s25, 3
        %s544 = scalar_select %p543, %s25, 3
        %s545 = smul.addr %s544, 8
        %s546 = smul.addr %s545, 8
        %s547 = scalar_lea.vmem %s15, %s546
      $region80: #{tpu_custom_call.1} parent=47 // pred_fallthru
        _
      // Predicated region
      $region81: #{tpu_custom_call.1} parent=47 // pred_check
        %p548 = pneg %p421
      $region82: #{tpu_custom_call.1} parent=47 // pred_check_branch
        %550 = sbr.rel (%p548) target = $region84
      $region83: #{tpu_custom_call.1} parent=47 // pred_region
        %p551 = scmp.lt.s32.totalorder %s25, 3
        %s552 = scalar_select %p551, %s25, 3
        %s553 = scalar_lea.vmem %s16, %s552
      $region84: #{tpu_custom_call.1} parent=47 // pred_fallthru
        _
    $region48: #{tpu_custom_call.1} parent=5 // pred_fallthru
      _
    %p554 = scmp.le.s32.totalorder 1, %s25
    %p555 = scmp.lt.s32.totalorder %s25, 5
    %p556 = pnand %p554, %p555
    %p557 = pneg %p556
    // Predicated region
    $region85: #{tpu_custom_call.1} parent=5 // pred_check
      _
    $region86: #{tpu_custom_call.1} parent=5 // pred_check_branch
      %559 = sbr.rel (%p556) target = $region88
    $region87: #{tpu_custom_call.1} parent=5 // pred_region
      %s560 = ssub.s32 %s25, 1
      %p561 = pneg %p46
      %p562 = pneg %p43
      %p563 = pneg %p67
      %p564 = pneg %p64
      %p565 = pneg %p88
      %p566 = pneg %p85
      %p567 = pneg %p109
      %p568 = pneg %p106
      %p569 = pneg %p130
      %p570 = pneg %p127
      %p571 = pneg %p151
      %p572 = pneg %p148
      %p573 = pneg %p172
      %p574 = pneg %p169
      %p575 = pneg %p193
      %p576 = pneg %p190
      %p577 = scmp.lt.s32.totalorder %s30, 3
      %s578 = scalar_select %p577, %s30, 3
      %s579 = smul.addr %s578, 16
      %s580 = smul.addr %s579, 8
      %s581 = scalar_lea.vmem %s8, %s580
      %p582 = pneg %p219
      %p583 = pneg %p216
      %p584 = scmp.lt.s32.totalorder %s30, 3
      %s585 = scalar_select %p584, %s30, 3
      %s586 = smul.addr %s585, 4
      %s587 = scalar_lea.vmem %s9, %s586
      %p588 = pneg %p245
      %p589 = pneg %p242
      %p590 = scmp.lt.s32.totalorder %s30, 3
      %s591 = scalar_select %p590, %s30, 3
      %s592 = scalar_lea.vmem %s10, %s591
      %p593 = pneg %p271
      %p594 = pneg %p268
      %p595 = scmp.lt.s32.totalorder %s30, 3
      %s596 = scalar_select %p595, %s30, 3
      %s597 = smul.addr %s596, 8
      %s598 = smul.addr %s597, 8
      %s599 = scalar_lea.vmem %s11, %s598
      %p600 = pneg %p297
      %p601 = pneg %p294
      %p602 = scmp.lt.s32.totalorder %s30, 3
      %s603 = scalar_select %p602, %s30, 3
      %s604 = scalar_lea.vmem %s12, %s603
      %p605 = pneg %p323
      %p606 = pneg %p320
      %p607 = scmp.lt.s32.totalorder %s30, 3
      %s608 = scalar_select %p607, %s30, 3
      %s609 = smul.addr %s608, 16
      %s610 = smul.addr %s609, 8
      %s611 = scalar_lea.vmem %s13, %s610
      %p612 = pneg %p349
      %p613 = pneg %p346
      %p614 = scmp.lt.s32.totalorder %s30, 3
      %s615 = scalar_select %p614, %s30, 3
      %s616 = scalar_lea.vmem %s14, %s615
      %p617 = pneg %p375
      %p618 = pneg %p372
      %p619 = scmp.lt.s32.totalorder %s30, 3
      %s620 = scalar_select %p619, %s30, 3
      %s621 = smul.addr %s620, 8
      %s622 = smul.addr %s621, 8
      %s623 = scalar_lea.vmem %s15, %s622
      %p624 = pneg %p401
      %p625 = pneg %p398
      %p626 = scmp.lt.s32.totalorder %s30, 3
      %s627 = scalar_select %p626, %s30, 3
      %s628 = scalar_lea.vmem %s16, %s627
      %p629 = pneg %p427
      %p630 = pneg %p424
      %p631 = pneg %p448
      %p632 = pneg %p445
      %p633 = scmp.lt.s32.totalorder %s30, 3
      %s634 = scalar_select %p633, %s30, 3
      %s635 = smul.addr %s634, 16
      %s636 = smul.addr %s635, 8
      %s637 = scalar_lea.vmem %s8, %s636
      %p638 = scmp.lt.s32.totalorder %s30, 3
      %s639 = scalar_select %p638, %s30, 3
      %s640 = smul.addr %s639, 4
      %s641 = scalar_lea.vmem %s9, %s640
      %p642 = scmp.lt.s32.totalorder %s30, 3
      %s643 = scalar_select %p642, %s30, 3
      %s644 = scalar_lea.vmem %s10, %s643
      %p645 = scmp.lt.s32.totalorder %s30, 3
      %s646 = scalar_select %p645, %s30, 3
      %s647 = smul.addr %s646, 8
      %s648 = smul.addr %s647, 8
      %s649 = scalar_lea.vmem %s11, %s648
      %p650 = scmp.lt.s32.totalorder %s30, 3
      %s651 = scalar_select %p650, %s30, 3
      %s652 = scalar_lea.vmem %s12, %s651
      %p653 = scmp.lt.s32.totalorder %s30, 3
      %s654 = scalar_select %p653, %s30, 3
      %s655 = smul.addr %s654, 16
      %s656 = smul.addr %s655, 8
      %s657 = scalar_lea.vmem %s13, %s656
      %p658 = scmp.lt.s32.totalorder %s30, 3
      %s659 = scalar_select %p658, %s30, 3
      %s660 = scalar_lea.vmem %s14, %s659
      %p661 = scmp.lt.s32.totalorder %s30, 3
      %s662 = scalar_select %p661, %s30, 3
      %s663 = smul.addr %s662, 8
      %s664 = smul.addr %s663, 8
      %s665 = scalar_lea.vmem %s15, %s664
      %p666 = scmp.lt.s32.totalorder %s30, 3
      %s667 = scalar_select %p666, %s30, 3
      %s668 = scalar_lea.vmem %s16, %s667
      %p669 = scmp.eq.s32.totalorder %s30, 0
      // Predicated region
      $region89: #{tpu_custom_call.1} parent=87 // pred_check
        %p670 = pneg %p669
      $region90: #{tpu_custom_call.1} parent=87 // pred_check_branch
        %672 = sbr.rel (%p670) target = $region92
      $region91: #{tpu_custom_call.1} parent=87 // pred_region
        %v673 = vld [vmem:[%s0] sm:$0xff]
        %v674 = vld [vmem:[%s0 + $0x8] sm:$0xff]
        %v675 = vld [vmem:[%s4] sm:$0xff]
        %v676 = vld [vmem:[%s4 + $0x8] sm:$0x7]
        %v677 = vld [vmem:[%s5] sm:$0x1]
        %v679 = vperm.slane %v677, 0
        %vm681 = vcmask 89088
        %v683 = vsel %vm681, %v673, 0
        %v686 = vsel %vm681, %v674, 0
        %vm688 = vcmask 1042432
        %v690 = vsel %vm688, %v676, 0
        %692 = vmatpush.msra.mxu0 0.0
        %693 = vmatpush.msra.mxu0 0.0
        %694 = vmatpush.msra.mxu0 0.0
        %695 = vmatpush.msra.mxu0 0.0
        %696 = vmatpush.msra.mxu0 0.0
        %697 = vmatpush.msra.mxu0 0.0
        %698 = vmatpush.msra.mxu0 0.0
        %699 = vmatpush.msra.mxu0 0.0
        %700 = vmatpush.msra.mxu0 0.0
        %701 = vmatpush.msra.mxu0 0.0
        %702 = vmatpush.msra.mxu0 0.0
        %703 = vmatpush.msra.mxu0 0.0
        %704 = vmatpush.msra.mxu0 0.0
        %705 = vmatpush.msra.mxu0 0.0
        %706 = vmatpush.msra.mxu0 %v690
        %707 = vmatpush.msra.mxu0 %v675
        %708 = vmatmul.f32.gmra.mxu0 %v683
        %v709 = vpop.f32.mrf.mxu0
        %v710 = vadd.f32 %v679, %v709
        %711 = vmatmul.f32.gmra.mxu0 %v686
        %v712 = vpop.f32.mrf.mxu0
        %v713 = vadd.f32 %v679, %v712
        %714 = vdwg.mxu0
        %vm715 = vcmask 523264
        %716 = vst.msk [vmem:[#allocation2] sm:$0xff] %vm715, %v710
        %717 = vst.msk [vmem:[#allocation2 + $0x8] sm:$0xff] %vm715, %v713
      $region92: #{tpu_custom_call.1} parent=87 // pred_fallthru
        _
      %v718 = vld [vmem:[#allocation2] sm:$0xff]
      %v719 = vld [vmem:[#allocation2 + $0x8] sm:$0xff]
      %v720 = vld [vmem:[%s1] sm:$0xf]
      %v721 = vld [vmem:[%s1 + $0x4] sm:$0xf]
      %v722 = vld [vmem:[%s1 + $0x8] sm:$0xf]
      %v723 = vld [vmem:[%s1 + $0xc] sm:$0xf]
      %v724 = vunpack.c.l.bf16 %v720
      %v725 = vunpack.c.l.bf16 %v721
      %v726 = vunpack.c.l.bf16 %v722
      %v727 = vunpack.c.l.bf16 %v723
      %v728 = vld [vmem:[%s2] sm:$0xf]
      %v729 = vld [vmem:[%s2 + $0x4] sm:$0xf]
      %v730 = vld [vmem:[%s2 + $0x8] sm:$0xf]
      %v731 = vld [vmem:[%s2 + $0xc] sm:$0xf]
      %v732 = vunpack.c.l.bf16 %v728
      %v733 = vunpack.c.l.bf16 %v729
      %v734 = vunpack.c.l.bf16 %v730
      %v735 = vunpack.c.l.bf16 %v731
      %vm736 = vcmask 130048
      %v738 = vsel %vm736, %v732, 0
      %v741 = vsel %vm736, %v733, 0
      %v744 = vsel %vm736, %v734, 0
      %v747 = vsel %vm736, %v735, 0
      %749 = vmatpush.msra.mxu0 0.0
      %750 = vmatpush.msra.mxu0 0.0
      %751 = vmatpush.msra.mxu0 0.0
      %752 = vmatpush.msra.mxu0 0.0
      %753 = vmatpush.msra.mxu0 0.0
      %754 = vmatpush.msra.mxu0 0.0
      %755 = vmatpush.msra.mxu0 0.0
      %756 = vmatpush.msra.mxu0 0.0
      %757 = vmatpush.msra.mxu0 0.0
      %758 = vmatpush.msra.mxu0 0.0
      %759 = vmatpush.msra.mxu0 0.0
      %760 = vmatpush.msra.mxu0 0.0
      %761 = vmatpush.msra.mxu0 0.0
      %762 = vmatpush.msra.mxu0 0.0
      %763 = vmatpush.msra.mxu0 %v719
      %764 = vmatpush.msra.mxu0 %v718
      %765 = vmatmul.f32.gmra.mxu0 %v738
      %v766 = vpop.f32.mrf.mxu0
      %v767 = vadd.f32 0.0, %v766
      %768 = vmatmul.f32.gmra.mxu0 %v741
      %v769 = vpop.f32.mrf.mxu0
      %v770 = vadd.f32 0.0, %v769
      %771 = vmatmul.f32.gmra.mxu0 %v744
      %v772 = vpop.f32.mrf.mxu0
      %v773 = vadd.f32 0.0, %v772
      %774 = vmatmul.f32.gmra.mxu0 %v747
      %v775 = vpop.f32.mrf.mxu0
      %v776 = vadd.f32 0.0, %v775
      %777 = vdwg.mxu0
      %v779 = vsel %vm736, %v724, 0
      %v782 = vsel %vm736, %v725, 0
      %v785 = vsel %vm736, %v726, 0
      %v788 = vsel %vm736, %v727, 0
      %790 = vmatpush.msra.mxu0 0.0
      %791 = vmatpush.msra.mxu0 0.0
      %792 = vmatpush.msra.mxu0 0.0
      %793 = vmatpush.msra.mxu0 0.0
      %794 = vmatpush.msra.mxu0 0.0
      %795 = vmatpush.msra.mxu0 0.0
      %796 = vmatpush.msra.mxu0 0.0
      %797 = vmatpush.msra.mxu0 0.0
      %798 = vmatpush.msra.mxu0 0.0
      %799 = vmatpush.msra.mxu0 0.0
      %800 = vmatpush.msra.mxu0 0.0
      %801 = vmatpush.msra.mxu0 0.0
      %802 = vmatpush.msra.mxu0 0.0
      %803 = vmatpush.msra.mxu0 0.0
      %804 = vmatpush.msra.mxu0 %v719
      %805 = vmatpush.msra.mxu0 %v718
      %806 = vmatmul.f32.gmra.mxu0 %v779
      %v807 = vpop.f32.mrf.mxu0
      %v808 = vadd.f32 0.0, %v807
      %809 = vmatmul.f32.gmra.mxu0 %v782
      %v810 = vpop.f32.mrf.mxu0
      %v811 = vadd.f32 0.0, %v810
      %812 = vmatmul.f32.gmra.mxu0 %v785
      %v813 = vpop.f32.mrf.mxu0
      %v814 = vadd.f32 0.0, %v813
      %815 = vmatmul.f32.gmra.mxu0 %v788
      %v816 = vpop.f32.mrf.mxu0
      %v817 = vadd.f32 0.0, %v816
      %818 = vdwg.mxu0
      %823 = vrot.lane.b32.xlu0 %v808, 64
      %v824 = vpop.permute.xlu0 %823
      %825 = vrot.lane.b32.xlu0 %v811, 64
      %v826 = vpop.permute.xlu0 %825
      %827 = vrot.lane.b32.xlu0 %v814, 64
      %v828 = vpop.permute.xlu0 %827
      %829 = vrot.lane.b32.xlu0 %v817, 64
      %v830 = vpop.permute.xlu0 %829
      %vm835 = vcmask 523264
      %v836 = vsel %vm835, %v767, %v824
      %v837 = vsel %vm835, %v770, %v826
      %v838 = vsel %vm835, %v773, %v828
      %v839 = vsel %vm835, %v776, %v830
      %v840 = vld [vmem:[%s637] sm:$0xff]
      %v841 = vld [vmem:[%s637 + $0x8] sm:$0xff]
      %v842 = vld [vmem:[%s637 + $0x10] sm:$0xff]
      %v843 = vld [vmem:[%s637 + $0x18] sm:$0xff]
      %v844 = vld [vmem:[%s637 + $0x20] sm:$0xff]
      %v845 = vld [vmem:[%s637 + $0x28] sm:$0xff]
      %v846 = vld [vmem:[%s637 + $0x30] sm:$0xff]
      %v847 = vld [vmem:[%s637 + $0x38] sm:$0xff]
      %v848 = vld [vmem:[%s637 + $0x40] sm:$0xff]
      %v849 = vld [vmem:[%s637 + $0x48] sm:$0xff]
      %v850 = vld [vmem:[%s637 + $0x50] sm:$0xff]
      %v851 = vld [vmem:[%s637 + $0x58] sm:$0xff]
      %v852 = vld [vmem:[%s637 + $0x60] sm:$0xff]
      %v853 = vld [vmem:[%s637 + $0x68] sm:$0xff]
      %v854 = vld [vmem:[%s637 + $0x70] sm:$0xff]
      %v855 = vld [vmem:[%s637 + $0x78] sm:$0xff]
      %v856 = vld [vmem:[%s3] sm:$0xff]
      %v857 = vld [vmem:[%s3 + $0x8] sm:$0xff]
      %v858 = vld [vmem:[%s3 + $0x10] sm:$0xff]
      %v859 = vld [vmem:[%s3 + $0x18] sm:$0xff]
      %v860 = vld [vmem:[%s641] sm:$0xf]
      %vm861 = vcmask 31744
      %v863 = vsel %vm861, %v856, 0
      %v866 = vsel %vm861, %v857, 0
      %v869 = vsel %vm861, %v858, 0
      %v872 = vsel %vm861, %v859, 0
      %vm874 = vcmask 1043456
      %v876 = vsel %vm874, %v860, 0
      %878 = vmatpush.msra.mxu0 0.0
      %879 = vmatpush.msra.mxu0 0.0
      %880 = vmatpush.msra.mxu0 0.0
      %881 = vmatpush.msra.mxu0 0.0
      %882 = vmatpush.msra.mxu0 0.0
      %883 = vmatpush.msra.mxu0 0.0
      %884 = vmatpush.msra.mxu0 0.0
      %885 = vmatpush.msra.mxu0 0.0
      %886 = vmatpush.msra.mxu0 0.0
      %887 = vmatpush.msra.mxu0 0.0
      %888 = vmatpush.msra.mxu0 0.0
      %889 = vmatpush.msra.mxu0 0.0
      %890 = vmatpush.msra.mxu0 0.0
      %891 = vmatpush.msra.mxu0 0.0
      %892 = vmatpush.msra.mxu0 0.0
      %893 = vmatpush.msra.mxu0 %v876
      %894 = vmatmul.f32.gmra.mxu0 %v863
      %v895 = vpop.f32.mrf.mxu0
      %v896 = vadd.f32 0.0, %v895
      %897 = vmatmul.f32.gmra.mxu0 %v866
      %v898 = vpop.f32.mrf.mxu0
      %v899 = vadd.f32 0.0, %v898
      %900 = vmatmul.f32.gmra.mxu0 %v869
      %v901 = vpop.f32.mrf.mxu0
      %v902 = vadd.f32 0.0, %v901
      %903 = vmatmul.f32.gmra.mxu0 %v872
      %v904 = vpop.f32.mrf.mxu0
      %v905 = vadd.f32 0.0, %v904
      %906 = vdwg.mxu0
      %907 = vmatpush.msra.mxu0 %v855
      %908 = vmatpush.msra.mxu0 %v854
      %909 = vmatpush.msra.mxu0 %v853
      %910 = vmatpush.msra.mxu0 %v852
      %911 = vmatpush.msra.mxu0 %v851
      %912 = vmatpush.msra.mxu0 %v850
      %913 = vmatpush.msra.mxu0 %v849
      %914 = vmatpush.msra.mxu0 %v848
      %915 = vmatpush.msra.mxu0 %v847
      %916 = vmatpush.msra.mxu0 %v846
      %917 = vmatpush.msra.mxu0 %v845
      %918 = vmatpush.msra.mxu0 %v844
      %919 = vmatpush.msra.mxu0 %v843
      %920 = vmatpush.msra.mxu0 %v842
      %921 = vmatpush.msra.mxu0 %v841
      %922 = vmatpush.msra.mxu0 %v840
      %923 = vmatmul.f32.gmra.mxu0 %v836
      %v924 = vpop.f32.mrf.mxu0
      %v925 = vadd.f32 %v896, %v924
      %926 = vmatmul.f32.gmra.mxu0 %v837
      %v927 = vpop.f32.mrf.mxu0
      %v928 = vadd.f32 %v899, %v927
      %929 = vmatmul.f32.gmra.mxu0 %v838
      %v930 = vpop.f32.mrf.mxu0
      %v931 = vadd.f32 %v902, %v930
      %932 = vmatmul.f32.gmra.mxu0 %v839
      %v933 = vpop.f32.mrf.mxu0
      %v934 = vadd.f32 %v905, %v933
      %935 = vdwg.mxu0
      %v936 = vld [vmem:[%s644] sm:$0x1]
      %v938 = vperm.slane %v936, 0
      %v940 = vadd.f32 %v925, %v938
      %v941 = vadd.f32 %v928, %v938
      %v942 = vadd.f32 %v931, %v938
      %v943 = vadd.f32 %v934, %v938
      %v944 = vmax.f32 %v940, 0.0
      %v945 = vmax.f32 %v941, 0.0
      %v946 = vmax.f32 %v942, 0.0
      %v947 = vmax.f32 %v943, 0.0
      %v948 = vld [vmem:[%s649] sm:$0xff]
      %v949 = vld [vmem:[%s649 + $0x8] sm:$0xff]
      %v950 = vld [vmem:[%s649 + $0x10] sm:$0xff]
      %v951 = vld [vmem:[%s649 + $0x18] sm:$0xff]
      %v952 = vld [vmem:[%s649 + $0x20] sm:$0xff]
      %v953 = vld [vmem:[%s649 + $0x28] sm:$0xff]
      %v954 = vld [vmem:[%s649 + $0x30] sm:$0xff]
      %v955 = vld [vmem:[%s649 + $0x38] sm:$0xff]
      %v956 = vld [vmem:[%s652] sm:$0x1]
      %v958 = vperm.slane %v956, 0
      %v961 = vsel %vm835, %v944, 0
      %v964 = vsel %vm835, %v945, 0
      %v967 = vsel %vm835, %v946, 0
      %v970 = vsel %vm835, %v947, 0
      %972 = vmatpush.msra.mxu0 0.0
      %973 = vmatpush.msra.mxu0 0.0
      %974 = vmatpush.msra.mxu0 0.0
      %975 = vmatpush.msra.mxu0 0.0
      %976 = vmatpush.msra.mxu0 0.0
      %977 = vmatpush.msra.mxu0 0.0
      %978 = vmatpush.msra.mxu0 0.0
      %979 = vmatpush.msra.mxu0 0.0
      %980 = vmatpush.msra.mxu0 %v955
      %981 = vmatpush.msra.mxu0 %v954
      %982 = vmatpush.msra.mxu0 %v953
      %983 = vmatpush.msra.mxu0 %v952
      %984 = vmatpush.msra.mxu0 %v951
      %985 = vmatpush.msra.mxu0 %v950
      %986 = vmatpush.msra.mxu0 %v949
      %987 = vmatpush.msra.mxu0 %v948
      %988 = vmatmul.f32.gmra.mxu0 %v961
      %v989 = vpop.f32.mrf.mxu0
      %v990 = vadd.f32 %v958, %v989
      %991 = vmatmul.f32.gmra.mxu0 %v964
      %v992 = vpop.f32.mrf.mxu0
      %v993 = vadd.f32 %v958, %v992
      %994 = vmatmul.f32.gmra.mxu0 %v967
      %v995 = vpop.f32.mrf.mxu0
      %v996 = vadd.f32 %v958, %v995
      %997 = vmatmul.f32.gmra.mxu0 %v970
      %v998 = vpop.f32.mrf.mxu0
      %v999 = vadd.f32 %v958, %v998
      %1000 = vdwg.mxu0
      %v1001 = vmax.f32 %v990, 0.0
      %v1002 = vmax.f32 %v993, 0.0
      %v1003 = vmax.f32 %v996, 0.0
      %v1004 = vmax.f32 %v999, 0.0
      %1005 = vxpose.xlu0.b32.start [1/16] %v732, 128
      %1006 = vxpose.xlu0.b32.cont [2/16] %v733, 128
      %1007 = vxpose.xlu0.b32.cont [3/16] %v734, 128
      %1008 = vxpose.xlu0.b32.cont [4/16] %v735, 128
      %1009 = vxpose.xlu0.b32.cont [5/16] 0.0, 128
      %1010 = vxpose.xlu0.b32.cont [6/16] 0.0, 128
      %1011 = vxpose.xlu0.b32.cont [7/16] 0.0, 128
      %1012 = vxpose.xlu0.b32.cont [8/16] 0.0, 128
      %1013 = vxpose.xlu0.b32.cont [9/16] 0.0, 128
      %1014 = vxpose.xlu0.b32.cont [10/16] 0.0, 128
      %1015 = vxpose.xlu0.b32.cont [11/16] 0.0, 128
      %1016 = vxpose.xlu0.b32.cont [12/16] 0.0, 128
      %1017 = vxpose.xlu0.b32.cont [13/16] 0.0, 128
      %1018 = vxpose.xlu0.b32.cont [14/16] 0.0, 128
      %1019 = vxpose.xlu0.b32.cont [15/16] 0.0, 128
      %1020 = vxpose.xlu0.b32.end [16/16] 0.0, 128
      %v1021 = vpop.trf.xlu0
      %v1022 = vpop.trf.xlu0
      %v1023 = vpop.trf.xlu0
      %v1024 = vpop.trf.xlu0
      %v1025 = vpop.trf.xlu0
      %v1026 = vpop.trf.xlu0
      %v1027 = vpop.trf.xlu0
      %v1028 = vpop.trf.xlu0
      %v1029 = vpop.trf.xlu0
      %v1030 = vpop.trf.xlu0
      %v1031 = vpop.trf.xlu0
      %v1032 = vpop.trf.xlu0
      %v1033 = vpop.trf.xlu0
      %v1034 = vpop.trf.xlu0
      %v1035 = vpop.trf.xlu0
      %v1036 = vpop.trf.xlu0
      %vm1037 = vcmask 261120
      %v1039 = vsel %vm1037, %v1021, 0
      %v1042 = vsel %vm1037, %v1022, 0
      %1044 = vmatpush.msra.mxu0 0.0
      %1045 = vmatpush.msra.mxu0 0.0
      %1046 = vmatpush.msra.mxu0 0.0
      %1047 = vmatpush.msra.mxu0 0.0
      %1048 = vmatpush.msra.mxu0 0.0
      %1049 = vmatpush.msra.mxu0 0.0
      %1050 = vmatpush.msra.mxu0 0.0
      %1051 = vmatpush.msra.mxu0 0.0
      %1052 = vmatpush.msra.mxu0 0.0
      %1053 = vmatpush.msra.mxu0 0.0
      %1054 = vmatpush.msra.mxu0 0.0
      %1055 = vmatpush.msra.mxu0 0.0
      %1056 = vmatpush.msra.mxu0 %v1004
      %1057 = vmatpush.msra.mxu0 %v1003
      %1058 = vmatpush.msra.mxu0 %v1002
      %1059 = vmatpush.msra.mxu0 %v1001
      %1060 = vmatmul.f32.gmra.mxu0 %v1039
      %v1061 = vpop.f32.mrf.mxu0
      %v1062 = vadd.f32 0.0, %v1061
      %1063 = vmatmul.f32.gmra.mxu0 %v1042
      %v1064 = vpop.f32.mrf.mxu0
      %v1065 = vadd.f32 0.0, %v1064
      %1066 = vdwg.mxu0
      %1069 = vrot.lane.b32.xlu0 %v1062, 64
      %v1070 = vpop.permute.xlu0 %1069
      %1071 = vrot.lane.b32.xlu0 %v1065, 64
      %v1072 = vpop.permute.xlu0 %1071
      %v1075 = vsel %vm835, %v718, %v1070
      %v1076 = vsel %vm835, %v719, %v1072
      %v1077 = vld [vmem:[%s657] sm:$0xff]
      %v1078 = vld [vmem:[%s657 + $0x8] sm:$0xff]
      %v1079 = vld [vmem:[%s657 + $0x10] sm:$0xff]
      %v1080 = vld [vmem:[%s657 + $0x18] sm:$0xff]
      %v1081 = vld [vmem:[%s657 + $0x20] sm:$0xff]
      %v1082 = vld [vmem:[%s657 + $0x28] sm:$0xff]
      %v1083 = vld [vmem:[%s657 + $0x30] sm:$0xff]
      %v1084 = vld [vmem:[%s657 + $0x38] sm:$0xff]
      %v1085 = vld [vmem:[%s657 + $0x40] sm:$0xff]
      %v1086 = vld [vmem:[%s657 + $0x48] sm:$0xff]
      %v1087 = vld [vmem:[%s657 + $0x50] sm:$0xff]
      %v1088 = vld [vmem:[%s657 + $0x58] sm:$0xff]
      %v1089 = vld [vmem:[%s657 + $0x60] sm:$0xff]
      %v1090 = vld [vmem:[%s657 + $0x68] sm:$0xff]
      %v1091 = vld [vmem:[%s657 + $0x70] sm:$0xff]
      %v1092 = vld [vmem:[%s657 + $0x78] sm:$0xff]
      %v1093 = vld [vmem:[%s660] sm:$0x1]
      %v1095 = vperm.slane %v1093, 0
      %1097 = vmatpush.msra.mxu0 %v1092
      %1098 = vmatpush.msra.mxu0 %v1091
      %1099 = vmatpush.msra.mxu0 %v1090
      %1100 = vmatpush.msra.mxu0 %v1089
      %1101 = vmatpush.msra.mxu0 %v1088
      %1102 = vmatpush.msra.mxu0 %v1087
      %1103 = vmatpush.msra.mxu0 %v1086
      %1104 = vmatpush.msra.mxu0 %v1085
      %1105 = vmatpush.msra.mxu0 %v1084
      %1106 = vmatpush.msra.mxu0 %v1083
      %1107 = vmatpush.msra.mxu0 %v1082
      %1108 = vmatpush.msra.mxu0 %v1081
      %1109 = vmatpush.msra.mxu0 %v1080
      %1110 = vmatpush.msra.mxu0 %v1079
      %1111 = vmatpush.msra.mxu0 %v1078
      %1112 = vmatpush.msra.mxu0 %v1077
      %1113 = vmatmul.f32.gmra.mxu0 %v1075
      %v1114 = vpop.f32.mrf.mxu0
      %v1115 = vadd.f32 %v1095, %v1114
      %1116 = vmatmul.f32.gmra.mxu0 %v1076
      %v1117 = vpop.f32.mrf.mxu0
      %v1118 = vadd.f32 %v1095, %v1117
      %1119 = vdwg.mxu0
      %v1120 = vmax.f32 %v1115, 0.0
      %v1121 = vmax.f32 %v1118, 0.0
      %v1122 = vld [vmem:[%s665] sm:$0xff]
      %v1123 = vld [vmem:[%s665 + $0x8] sm:$0xff]
      %v1124 = vld [vmem:[%s665 + $0x10] sm:$0xff]
      %v1125 = vld [vmem:[%s665 + $0x18] sm:$0xff]
      %v1126 = vld [vmem:[%s665 + $0x20] sm:$0xff]
      %v1127 = vld [vmem:[%s665 + $0x28] sm:$0xff]
      %v1128 = vld [vmem:[%s665 + $0x30] sm:$0xff]
      %v1129 = vld [vmem:[%s665 + $0x38] sm:$0xff]
      %v1130 = vld [vmem:[%s668] sm:$0x1]
      %v1132 = vperm.slane %v1130, 0
      %v1135 = vsel %vm835, %v1120, 0
      %v1138 = vsel %vm835, %v1121, 0
      %1140 = vmatpush.msra.mxu0 0.0
      %1141 = vmatpush.msra.mxu0 0.0
      %1142 = vmatpush.msra.mxu0 0.0
      %1143 = vmatpush.msra.mxu0 0.0
      %1144 = vmatpush.msra.mxu0 0.0
      %1145 = vmatpush.msra.mxu0 0.0
      %1146 = vmatpush.msra.mxu0 0.0
      %1147 = vmatpush.msra.mxu0 0.0
      %1148 = vmatpush.msra.mxu0 %v1129
      %1149 = vmatpush.msra.mxu0 %v1128
      %1150 = vmatpush.msra.mxu0 %v1127
      %1151 = vmatpush.msra.mxu0 %v1126
      %1152 = vmatpush.msra.mxu0 %v1125
      %1153 = vmatpush.msra.mxu0 %v1124
      %1154 = vmatpush.msra.mxu0 %v1123
      %1155 = vmatpush.msra.mxu0 %v1122
      %1156 = vmatmul.f32.gmra.mxu0 %v1135
      %v1157 = vpop.f32.mrf.mxu0
      %v1158 = vadd.f32 %v1132, %v1157
      %1159 = vmatmul.f32.gmra.mxu0 %v1138
      %v1160 = vpop.f32.mrf.mxu0
      %v1161 = vadd.f32 %v1132, %v1160
      %1162 = vdwg.mxu0
      %v1163 = vmax.f32 %v1158, 0.0
      %v1164 = vmax.f32 %v1161, 0.0
      %v1165 = vadd.f32 %v718, %v1163
      %v1166 = vadd.f32 %v719, %v1164
      %1167 = vst.msk [vmem:[#allocation2] sm:$0xff] %vm835, %v1165
      %1168 = vst.msk [vmem:[#allocation2 + $0x8] sm:$0xff] %vm835, %v1166
      %p1169 = scmp.eq.s32.totalorder %s30, 3
      // Predicated region
      $region93: #{tpu_custom_call.1} parent=87 // pred_check
        %p1170 = pneg %p1169
      $region94: #{tpu_custom_call.1} parent=87 // pred_check_branch
        %1172 = sbr.rel (%p1170) target = $region96
      $region95: #{tpu_custom_call.1} parent=87 // pred_region
        %v1173 = vld [vmem:[%s6] sm:$0xff]
        %v1174 = vld [vmem:[%s6 + $0x8] sm:$0xff]
        %v1175 = vld [vmem:[%s6 + $0x10] sm:$0xff]
        %v1176 = vld [vmem:[%s6 + $0x18] sm:$0xff]
        %v1177 = vld [vmem:[%s6 + $0x20] sm:$0xff]
        %v1178 = vld [vmem:[%s6 + $0x28] sm:$0xff]
        %v1179 = vld [vmem:[%s6 + $0x30] sm:$0xff]
        %v1180 = vld [vmem:[%s6 + $0x38] sm:$0xff]
        %v1181 = vld [vmem:[#allocation3] sm:$0x1]
        %v1183 = vperm.slane %v1181, 0
        %v1186 = vsel %vm835, %v1165, 0
        %v1189 = vsel %vm835, %v1166, 0
        %1191 = vmatpush.msra.mxu0 0.0
        %1192 = vmatpush.msra.mxu0 0.0
        %1193 = vmatpush.msra.mxu0 0.0
        %1194 = vmatpush.msra.mxu0 0.0
        %1195 = vmatpush.msra.mxu0 0.0
        %1196 = vmatpush.msra.mxu0 0.0
        %1197 = vmatpush.msra.mxu0 0.0
        %1198 = vmatpush.msra.mxu0 0.0
        %1199 = vmatpush.msra.mxu0 %v1180
        %1200 = vmatpush.msra.mxu0 %v1179
        %1201 = vmatpush.msra.mxu0 %v1178
        %1202 = vmatpush.msra.mxu0 %v1177
        %1203 = vmatpush.msra.mxu0 %v1176
        %1204 = vmatpush.msra.mxu0 %v1175
        %1205 = vmatpush.msra.mxu0 %v1174
        %1206 = vmatpush.msra.mxu0 %v1173
        %1207 = vmatmul.f32.gmra.mxu0 %v1186
        %v1208 = vpop.f32.mrf.mxu0
        %v1209 = vadd.f32 %v1183, %v1208
        %1210 = vmatmul.f32.gmra.mxu0 %v1189
        %v1211 = vpop.f32.mrf.mxu0
        %v1212 = vadd.f32 %v1183, %v1211
        %1213 = vdwg.mxu0
        %vm1214 = vcmask 7168
        %1215 = vst.msk [vmem:[%s17] sm:$0xff] %vm1214, %v1209
        %1216 = vst.msk [vmem:[%s17 + $0x8] sm:$0xff] %vm1214, %v1212
      $region96: #{tpu_custom_call.1} parent=87 // pred_fallthru
        _
      // Predicated region
      $region97: #{tpu_custom_call.1} parent=87 // pred_check
        %p1217 = pneg %p445
      $region98: #{tpu_custom_call.1} parent=87 // pred_check_branch
        %1219 = sbr.rel (%p1217) target = $region100
      $region99: #{tpu_custom_call.1} parent=87 // pred_region
        _
      $region100: #{tpu_custom_call.1} parent=87 // pred_fallthru
        _
      // Predicated region
      $region101: #{tpu_custom_call.1} parent=87 // pred_check
        %p1220 = pneg %p445
      $region102: #{tpu_custom_call.1} parent=87 // pred_check_branch
        %1222 = sbr.rel (%p1220) target = $region104
      $region103: #{tpu_custom_call.1} parent=87 // pred_region
        _
      $region104: #{tpu_custom_call.1} parent=87 // pred_fallthru
        _
    $region88: #{tpu_custom_call.1} parent=5 // pred_fallthru
      _
    %p1223 = scmp.le.s32.totalorder 2, %s25
    // Predicated region
    $region105: #{tpu_custom_call.1} parent=5 // pred_check
      %p1224 = pneg %p1223
    $region106: #{tpu_custom_call.1} parent=5 // pred_check_branch
      %1226 = sbr.rel (%p1224) target = $region108
    $region107: #{tpu_custom_call.1} parent=5 // pred_region
      %s1227 = ssub.s32 %s25, 2
    $region108: #{tpu_custom_call.1} parent=5 // pred_fallthru
      _
  $region6: #{tpu_custom_call.1} parent=0 // loop_footer
    %s29 = sadd.s32 1, %s25
  $region7: #{tpu_custom_call.1} parent=0 // loop_footer_branch
    %24 = sbr.rel target = $region3
  $region8: #{tpu_custom_call.1} parent=0 // loop_exit
    _

</llo_original>
